<compile_context>
chip_gen: v5e
topology: v5e:2x2
jax: 0.10.0
libtpu: 0.0.40
codegen_flags: <defaults>
</compile_context>

<pallas_src>
import functools

import jax
import jax.numpy as jnp
import numpy as np
from jax.experimental import pallas as pl
from jax.experimental.pallas import tpu as pltpu

# The 9 (row, col) plane shifts of the 3x3 conv expressed in phase space.
_SHIFTS = tuple((rs, cs) for rs in (-1, 0, 1) for cs in (-1, 0, 1))


def _mix(m, v, cols=None):
    """(R, K) x (K, L) channel/phase mix as whole-slab broadcast-FMAs (exact f32).

    K is tiny here (<=16) so this stays on the VPU; for large channel counts
    replace with jnp.dot(m, v, preferred_element_type=jnp.float32) (MXU).
    `cols` optionally restricts the contraction to statically-nonzero columns.
    """
    if cols is None:
        cols = range(m.shape[1])
    acc = None
    for t in cols:
        term = m[:, t:t + 1] * v[t:t + 1, :]
        acc = term if acc is None else acc + term
    return acc


def _active_cols(rs, cs, Cout):
    """Statically-nonzero source phase/channel columns of the mix for shift (rs, cs)."""
    act_sa = [sa for sa in (0, 1)
              if any(0 <= 2 * rs + sa - a + 1 <= 2 for a in (0, 1))]
    act_sb = [sb for sb in (0, 1)
              if any(0 <= 2 * cs + sb - b + 1 <= 2 for b in (0, 1))]
    return [(sa * 2 + sb) * Cout + ci
            for sa in act_sa for sb in act_sb for ci in range(Cout)]


def _res_transpose_kernel(c_ref, mask_ref, x_ref, o_ref, *, Cin, Cout, W, L):
    """Single invocation over the whole (channels, B*H*W) slab.

    c_ref   : (11*P, P) packed constants, P = 4*Cout:
                rows [0, P)    : ConvT mix matrix (cols 0..Cin used, rest zero)
                rows [P, 2P)   : col 0 = ConvT bias, col 1 = Conv2 bias
                rows [2P, 11P) : nine (P, P) per-shift 3x3 mixing matrices
    mask_ref: (8, L) f32 0/1 boundary masks, one per non-center shift
    x_ref   : (Cin, L) input slab, L = B*H*W lanes
    o_ref   : (P, L) output in phase layout
    """
    P = 4 * Cout
    x = x_ref[...]                                            # (Cin, L)

    # ---- ConvTranspose2d(k=2, s=2) + bias + ReLU: one mix for all 4 phases ----
    d = _mix(c_ref[0:P, 0:Cin], x) + c_ref[P:2 * P, 0:1]      # (P, L)
    d = jnp.maximum(d, 0.0)

    # ---- residual (nearest 2x upsample of x == x in every phase) + conv2 bias -
    acc = jnp.concatenate([x, x, x, x], axis=0) + c_ref[P:2 * P, 1:2]

    # ---- Conv2d(3x3, pad=1) in phase space: 9 rolls + masked phase/channel mix
    # (unrolled on purpose; per perf review, only restructure if the bundle dump
    #  shows vreg spills -- acc is consumed immediately after every shift)
    mi = 0
    for idx, (rs, cs) in enumerate(_SHIFTS):
        s = rs * W + cs
        # shifted[k] == d[k + s] (zero outside each H x W image plane via mask)
        rolled = d if s == 0 else pltpu.roll(d, shift=(-s) % L, axis=1)
        if (rs, cs) != (0, 0):
            rolled = rolled * mask_ref[mi:mi + 1, :]
            mi += 1
        a = c_ref[(2 + idx) * P:(3 + idx) * P, :]
        acc = acc + _mix(a, rolled, _active_cols(rs, cs, Cout))

    o_ref[...] = acc


def res_transpose(x, w1, b1, w2, b2):
    """x: (B,Cin,H,W); w1: (Cin,Cout,2,2); b1: (Cout,); w2: (Cout,Cin,3,3); b2: (Cout,)."""
    B, Cin, H, W = x.shape
    Cout = w1.shape[1]
    assert w1.shape == (Cin, Cout, 2, 2)
    assert w2.shape == (Cout, Cin, 3, 3)
    # sizematch adds the Cin-channel upsampled input to the Cout-channel conv output.
    assert Cin == Cout, "residual add (sizematch) requires channels_in == channels_out"
    HW = H * W
    L = B * HW                           # fused batch*spatial lane axis
    P = 4 * Cout
    f32 = jnp.float32

    # Lane-dense input slab: lane k -> (n, i, j) = (k // HW, (k % HW) // W, k % W).
    x_f = jnp.transpose(x.astype(f32), (1, 0, 2, 3)).reshape(Cin, L)

    # ---- packed constants (one VMEM operand) ----------------------------------
    # ConvT weights, phase-major rows: w1m[(a*2+b)*Cout + co, ci] = w1[ci, co, a, b].
    w1m = jnp.transpose(w1.astype(f32), (2, 3, 1, 0)).reshape(P, Cin)
    blk0 = jnp.zeros((P, P), f32).at[:, :Cin].set(w1m)
    blk1 = jnp.zeros((P, P), f32)
    blk1 = blk1.at[:, 0].set(jnp.tile(b1.astype(f32), 4))
    blk1 = blk1.at[:, 1].set(jnp.tile(b2.astype(f32), 4))
    # Per-shift phase/channel mixing matrices of the 3x3 conv in phase space:
    #   A[(a*2+b)*Cout + co, (sa*2+sb)*Cout + ci] = w2[co, ci, di, dj]
    # with di = 2*rs + sa - a + 1, dj = 2*cs + sb - b + 1 when inside the window.
    w2f = w2.astype(f32)
    a_mats = []
    for (rs, cs) in _SHIFTS:
        A = jnp.zeros((P, P), f32)
        for a in range(2):
            for b in range(2):
                for sa in range(2):
                    for sb in range(2):
                        di = 2 * rs + sa - a + 1
                        dj = 2 * cs + sb - b + 1
                        if 0 <= di <= 2 and 0 <= dj <= 2:
                            p, sp = a * 2 + b, sa * 2 + sb
                            A = A.at[p * Cout:(p + 1) * Cout,
                                     sp * Cout:(sp + 1) * Cout].set(w2f[:, :, di, dj])
        a_mats.append(A)
    consts = jnp.concatenate([blk0, blk1] + a_mats, axis=0)           # (11*P, P)

    # ---- precomputed boundary masks (derived from lane % HW -> no cross-image
    #      leakage when pltpu.roll wraps inside the fused B*HW lane axis) -------
    lane = np.arange(L)
    ii = (lane % HW) // W
    jj = lane % W
    mask_rows = []
    for (rs, cs) in _SHIFTS:
        if (rs, cs) == (0, 0):
            continue
        m = np.ones(L, dtype=bool)
        if rs == -1:
            m &= ii >= 1
        elif rs == 1:
            m &= ii < H - 1
        if cs == -1:
            m &= jj >= 1
        elif cs == 1:
            m &= jj < W - 1
        mask_rows.append(m)
    masks = jnp.asarray(np.stack(mask_rows), dtype=f32)               # (8, L)

    kernel = functools.partial(_res_transpose_kernel, Cin=Cin, Cout=Cout, W=W, L=L)

    phases = pl.pallas_call(
        kernel,
        out_shape=jax.ShapeDtypeStruct((P, L), f32),
        grid=(1,),                                    # one step over the whole slab
        in_specs=[
            pl.BlockSpec((11 * P, P), lambda i: (0, 0)),   # packed constants (VMEM)
            pl.BlockSpec((8, L), lambda i: (0, 0)),        # boundary masks   (VMEM)
            pl.BlockSpec((Cin, L), lambda i: (0, 0)),      # input slab       (VMEM)
        ],
        out_specs=pl.BlockSpec((P, L), lambda i: (0, 0)),
    )(consts, masks, x_f)

    # Un-phase back to NCHW (pure glue; negligible at this size).
    # TODO(synk): for large H*W fold this even/odd interleave into the kernel
    # (XLU roll + select on alternating lane masks) and tile the lane axis to
    # avoid a second HBM pass and respect v7x's 64 MiB VMEM.
    ph = phases.reshape(2, 2, Cout, B, H, W)
    return ph.transpose(3, 2, 4, 0, 5, 1).reshape(B, Cout, 2 * H, 2 * W)


def res_transpose_ref(x, w1, b1, w2, b2):
    """Pure-JAX reference matching the PyTorch module semantics."""
    d = jnp.einsum('ncij,cdab->ndiajb', x, w1).reshape(
        x.shape[0], w1.shape[1], 2 * x.shape[2], 2 * x.shape[3])
    d = d + b1[None, :, None, None]
    r = jax.nn.relu(d)
    c = jax.lax.conv_general_dilated(
        r, w2, window_strides=(1, 1), padding=((1, 1), (1, 1)),
        dimension_numbers=('NCHW', 'OIHW', 'NCHW'))
    c = c + b2[None, :, None, None]
    xu = jnp.repeat(jnp.repeat(x, 2, axis=2), 2, axis=3)   # sizematch (nearest 2x)
    return xu + c


if __name__ == "__main__":
    B, C, H, W = 2, 4, 16, 16     # channels_in == channels_out == 4
    key = jax.random.PRNGKey(0)
    k_x, k_w1, k_b1, k_w2, k_b2 = jax.random.split(key, 5)
    x = jax.random.normal(k_x, (B, C, H, W), jnp.float32)
    w1 = jax.random.normal(k_w1, (C, C, 2, 2), jnp.float32) * 0.3   # ConvTranspose2d weight (Cin,Cout,2,2)
    b1 = jax.random.normal(k_b1, (C,), jnp.float32) * 0.1
    w2 = jax.random.normal(k_w2, (C, C, 3, 3), jnp.float32) * 0.2   # Conv2d weight (Cout,Cin,3,3)
    b2 = jax.random.normal(k_b2, (C,), jnp.float32) * 0.1

    out = jax.block_until_ready(res_transpose(x, w1, b1, w2, b2))
    ref = res_transpose_ref(x, w1, b1, w2, b2)
    np.testing.assert_allclose(np.asarray(out), np.asarray(ref), atol=1e-4, rtol=1e-4)
    print("KERNEL_OK")
</pallas_src>

<mosaic_0001>
module attributes {stable_mosaic.version = 11 : i64} {
  func.func @_res_transpose_kernel(%arg0: i32, %arg1: memref<176x16xf32, #tpu.memory_space<vmem>>, %arg2: memref<8x512xf32, #tpu.memory_space<vmem>>, %arg3: memref<4x512xf32, #tpu.memory_space<vmem>>, %arg4: memref<16x512xf32, #tpu.memory_space<vmem>>) attributes {dimension_semantics = [#tpu.dimension_semantics<arbitrary>], iteration_bounds = array<i64: 1>, scalar_prefetch = 0 : i64, scratch_operands = 0 : i64, tpu.core_type = #tpu.core_type<tc>, window_params = [{pipeline_mode = #tpu.pipeline_mode<synchronous>, transform_indices = @transform_0, window_bounds = array<i64: 176, 16>}, {pipeline_mode = #tpu.pipeline_mode<synchronous>, transform_indices = @transform_1, window_bounds = array<i64: 8, 512>}, {pipeline_mode = #tpu.pipeline_mode<synchronous>, transform_indices = @transform_2, window_bounds = array<i64: 4, 512>}, {pipeline_mode = #tpu.pipeline_mode<synchronous>, transform_indices = @transform_3, window_bounds = array<i64: 16, 512>}]} {
    %c0 = arith.constant 0 : index
    %c0_0 = arith.constant 0 : index
    %0 = vector.load %arg3[%c0, %c0_0] : memref<4x512xf32, #tpu.memory_space<vmem>>, vector<4x512xf32>
    %c0_1 = arith.constant 0 : index
    %c0_2 = arith.constant 0 : index
    %1 = vector.load %arg1[%c0_1, %c0_2] : memref<176x16xf32, #tpu.memory_space<vmem>>, vector<16x4xf32>
    %2 = vector.extract_strided_slice %1 {offsets = [0, 0], sizes = [16, 1], strides = [1, 1]} : vector<16x4xf32> to vector<16x1xf32>
    %3 = vector.extract_strided_slice %0 {offsets = [0, 0], sizes = [1, 512], strides = [1, 1]} : vector<4x512xf32> to vector<1x512xf32>
    %4 = vector.broadcast %2 : vector<16x1xf32> to vector<16x512xf32>
    %5 = vector.broadcast %3 : vector<1x512xf32> to vector<16x512xf32>
    %6 = arith.mulf %4, %5 : vector<16x512xf32>
    %7 = vector.extract_strided_slice %1 {offsets = [0, 1], sizes = [16, 1], strides = [1, 1]} : vector<16x4xf32> to vector<16x1xf32>
    %8 = vector.extract_strided_slice %0 {offsets = [1, 0], sizes = [1, 512], strides = [1, 1]} : vector<4x512xf32> to vector<1x512xf32>
    %9 = vector.broadcast %7 : vector<16x1xf32> to vector<16x512xf32>
    %10 = vector.broadcast %8 : vector<1x512xf32> to vector<16x512xf32>
    %11 = arith.mulf %9, %10 : vector<16x512xf32>
    %12 = arith.addf %6, %11 : vector<16x512xf32>
    %13 = vector.extract_strided_slice %1 {offsets = [0, 2], sizes = [16, 1], strides = [1, 1]} : vector<16x4xf32> to vector<16x1xf32>
    %14 = vector.extract_strided_slice %0 {offsets = [2, 0], sizes = [1, 512], strides = [1, 1]} : vector<4x512xf32> to vector<1x512xf32>
    %15 = vector.broadcast %13 : vector<16x1xf32> to vector<16x512xf32>
    %16 = vector.broadcast %14 : vector<1x512xf32> to vector<16x512xf32>
    %17 = arith.mulf %15, %16 : vector<16x512xf32>
    %18 = arith.addf %12, %17 : vector<16x512xf32>
    %19 = vector.extract_strided_slice %1 {offsets = [0, 3], sizes = [16, 1], strides = [1, 1]} : vector<16x4xf32> to vector<16x1xf32>
    %20 = vector.extract_strided_slice %0 {offsets = [3, 0], sizes = [1, 512], strides = [1, 1]} : vector<4x512xf32> to vector<1x512xf32>
    %21 = vector.broadcast %19 : vector<16x1xf32> to vector<16x512xf32>
    %22 = vector.broadcast %20 : vector<1x512xf32> to vector<16x512xf32>
    %23 = arith.mulf %21, %22 : vector<16x512xf32>
    %24 = arith.addf %18, %23 : vector<16x512xf32>
    %c16 = arith.constant 16 : index
    %c0_3 = arith.constant 0 : index
    %25 = vector.load %arg1[%c16, %c0_3] : memref<176x16xf32, #tpu.memory_space<vmem>>, vector<16x1xf32>
    %26 = vector.broadcast %25 : vector<16x1xf32> to vector<16x512xf32>
    %27 = arith.addf %24, %26 : vector<16x512xf32>
    %cst = arith.constant 0.000000e+00 : f32
    %28 = vector.broadcast %cst : f32 to vector<16x512xf32>
    %29 = arith.maximumf %27, %28 : vector<16x512xf32>
    %30 = tpu.concatenate %0, %0, %0, %0 in 0 : vector<4x512xf32>, vector<4x512xf32>, vector<4x512xf32>, vector<4x512xf32> -> vector<16x512xf32>
    %c16_4 = arith.constant 16 : index
    %c1 = arith.constant 1 : index
    %31 = vector.load %arg1[%c16_4, %c1] : memref<176x16xf32, #tpu.memory_space<vmem>>, vector<16x1xf32>
    %32 = vector.broadcast %31 : vector<16x1xf32> to vector<16x512xf32>
    %33 = arith.addf %30, %32 : vector<16x512xf32>
    %c17_i32 = arith.constant 17 : i32
    %34 = tpu.dynamic_rotate %29 by %c17_i32 dim 1 : vector<16x512xf32>, i32 -> vector<16x512xf32>
    %c0_5 = arith.constant 0 : index
    %c0_6 = arith.constant 0 : index
    %35 = vector.load %arg2[%c0_5, %c0_6] : memref<8x512xf32, #tpu.memory_space<vmem>>, vector<1x512xf32>
    %36 = vector.broadcast %35 : vector<1x512xf32> to vector<16x512xf32>
    %37 = arith.mulf %34, %36 : vector<16x512xf32>
    %c32 = arith.constant 32 : index
    %c0_7 = arith.constant 0 : index
    %38 = vector.load %arg1[%c32, %c0_7] : memref<176x16xf32, #tpu.memory_space<vmem>>, vector<16x16xf32>
    %39 = vector.extract_strided_slice %38 {offsets = [0, 12], sizes = [16, 1], strides = [1, 1]} : vector<16x16xf32> to vector<16x1xf32>
    %40 = vector.extract_strided_slice %37 {offsets = [12, 0], sizes = [1, 512], strides = [1, 1]} : vector<16x512xf32> to vector<1x512xf32>
    %41 = vector.broadcast %39 : vector<16x1xf32> to vector<16x512xf32>
    %42 = vector.broadcast %40 : vector<1x512xf32> to vector<16x512xf32>
    %43 = arith.mulf %41, %42 : vector<16x512xf32>
    %44 = vector.extract_strided_slice %38 {offsets = [0, 13], sizes = [16, 1], strides = [1, 1]} : vector<16x16xf32> to vector<16x1xf32>
    %45 = vector.extract_strided_slice %37 {offsets = [13, 0], sizes = [1, 512], strides = [1, 1]} : vector<16x512xf32> to vector<1x512xf32>
    %46 = vector.broadcast %44 : vector<16x1xf32> to vector<16x512xf32>
    %47 = vector.broadcast %45 : vector<1x512xf32> to vector<16x512xf32>
    %48 = arith.mulf %46, %47 : vector<16x512xf32>
    %49 = arith.addf %43, %48 : vector<16x512xf32>
    %50 = vector.extract_strided_slice %38 {offsets = [0, 14], sizes = [16, 1], strides = [1, 1]} : vector<16x16xf32> to vector<16x1xf32>
    %51 = vector.extract_strided_slice %37 {offsets = [14, 0], sizes = [1, 512], strides = [1, 1]} : vector<16x512xf32> to vector<1x512xf32>
    %52 = vector.broadcast %50 : vector<16x1xf32> to vector<16x512xf32>
    %53 = vector.broadcast %51 : vector<1x512xf32> to vector<16x512xf32>
    %54 = arith.mulf %52, %53 : vector<16x512xf32>
    %55 = arith.addf %49, %54 : vector<16x512xf32>
    %56 = vector.extract_strided_slice %38 {offsets = [0, 15], sizes = [16, 1], strides = [1, 1]} : vector<16x16xf32> to vector<16x1xf32>
    %57 = vector.extract_strided_slice %37 {offsets = [15, 0], sizes = [1, 512], strides = [1, 1]} : vector<16x512xf32> to vector<1x512xf32>
    %58 = vector.broadcast %56 : vector<16x1xf32> to vector<16x512xf32>
    %59 = vector.broadcast %57 : vector<1x512xf32> to vector<16x512xf32>
    %60 = arith.mulf %58, %59 : vector<16x512xf32>
    %61 = arith.addf %55, %60 : vector<16x512xf32>
    %62 = arith.addf %33, %61 : vector<16x512xf32>
    %c16_i32 = arith.constant 16 : i32
    %63 = tpu.dynamic_rotate %29 by %c16_i32 dim 1 : vector<16x512xf32>, i32 -> vector<16x512xf32>
    %c1_8 = arith.constant 1 : index
    %c0_9 = arith.constant 0 : index
    %64 = vector.load %arg2[%c1_8, %c0_9] : memref<8x512xf32, #tpu.memory_space<vmem>>, vector<1x512xf32>
    %65 = vector.broadcast %64 : vector<1x512xf32> to vector<16x512xf32>
    %66 = arith.mulf %63, %65 : vector<16x512xf32>
    %c48 = arith.constant 48 : index
    %c0_10 = arith.constant 0 : index
    %67 = vector.load %arg1[%c48, %c0_10] : memref<176x16xf32, #tpu.memory_space<vmem>>, vector<16x16xf32>
    %68 = vector.extract_strided_slice %67 {offsets = [0, 8], sizes = [16, 1], strides = [1, 1]} : vector<16x16xf32> to vector<16x1xf32>
    %69 = vector.extract_strided_slice %66 {offsets = [8, 0], sizes = [1, 512], strides = [1, 1]} : vector<16x512xf32> to vector<1x512xf32>
    %70 = vector.broadcast %68 : vector<16x1xf32> to vector<16x512xf32>
    %71 = vector.broadcast %69 : vector<1x512xf32> to vector<16x512xf32>
    %72 = arith.mulf %70, %71 : vector<16x512xf32>
    %73 = vector.extract_strided_slice %67 {offsets = [0, 9], sizes = [16, 1], strides = [1, 1]} : vector<16x16xf32> to vector<16x1xf32>
    %74 = vector.extract_strided_slice %66 {offsets = [9, 0], sizes = [1, 512], strides = [1, 1]} : vector<16x512xf32> to vector<1x512xf32>
    %75 = vector.broadcast %73 : vector<16x1xf32> to vector<16x512xf32>
    %76 = vector.broadcast %74 : vector<1x512xf32> to vector<16x512xf32>
    %77 = arith.mulf %75, %76 : vector<16x512xf32>
    %78 = arith.addf %72, %77 : vector<16x512xf32>
    %79 = vector.extract_strided_slice %67 {offsets = [0, 10], sizes = [16, 1], strides = [1, 1]} : vector<16x16xf32> to vector<16x1xf32>
    %80 = vector.extract_strided_slice %66 {offsets = [10, 0], sizes = [1, 512], strides = [1, 1]} : vector<16x512xf32> to vector<1x512xf32>
    %81 = vector.broadcast %79 : vector<16x1xf32> to vector<16x512xf32>
    %82 = vector.broadcast %80 : vector<1x512xf32> to vector<16x512xf32>
    %83 = arith.mulf %81, %82 : vector<16x512xf32>
    %84 = arith.addf %78, %83 : vector<16x512xf32>
    %85 = vector.extract_strided_slice %67 {offsets = [0, 11], sizes = [16, 1], strides = [1, 1]} : vector<16x16xf32> to vector<16x1xf32>
    %86 = vector.extract_strided_slice %66 {offsets = [11, 0], sizes = [1, 512], strides = [1, 1]} : vector<16x512xf32> to vector<1x512xf32>
    %87 = vector.broadcast %85 : vector<16x1xf32> to vector<16x512xf32>
    %88 = vector.broadcast %86 : vector<1x512xf32> to vector<16x512xf32>
    %89 = arith.mulf %87, %88 : vector<16x512xf32>
    %90 = arith.addf %84, %89 : vector<16x512xf32>
    %91 = vector.extract_strided_slice %67 {offsets = [0, 12], sizes = [16, 1], strides = [1, 1]} : vector<16x16xf32> to vector<16x1xf32>
    %92 = vector.extract_strided_slice %66 {offsets = [12, 0], sizes = [1, 512], strides = [1, 1]} : vector<16x512xf32> to vector<1x512xf32>
    %93 = vector.broadcast %91 : vector<16x1xf32> to vector<16x512xf32>
    %94 = vector.broadcast %92 : vector<1x512xf32> to vector<16x512xf32>
    %95 = arith.mulf %93, %94 : vector<16x512xf32>
    %96 = arith.addf %90, %95 : vector<16x512xf32>
    %97 = vector.extract_strided_slice %67 {offsets = [0, 13], sizes = [16, 1], strides = [1, 1]} : vector<16x16xf32> to vector<16x1xf32>
    %98 = vector.extract_strided_slice %66 {offsets = [13, 0], sizes = [1, 512], strides = [1, 1]} : vector<16x512xf32> to vector<1x512xf32>
    %99 = vector.broadcast %97 : vector<16x1xf32> to vector<16x512xf32>
    %100 = vector.broadcast %98 : vector<1x512xf32> to vector<16x512xf32>
    %101 = arith.mulf %99, %100 : vector<16x512xf32>
    %102 = arith.addf %96, %101 : vector<16x512xf32>
    %103 = vector.extract_strided_slice %67 {offsets = [0, 14], sizes = [16, 1], strides = [1, 1]} : vector<16x16xf32> to vector<16x1xf32>
    %104 = vector.extract_strided_slice %66 {offsets = [14, 0], sizes = [1, 512], strides = [1, 1]} : vector<16x512xf32> to vector<1x512xf32>
    %105 = vector.broadcast %103 : vector<16x1xf32> to vector<16x512xf32>
    %106 = vector.broadcast %104 : vector<1x512xf32> to vector<16x512xf32>
    %107 = arith.mulf %105, %106 : vector<16x512xf32>
    %108 = arith.addf %102, %107 : vector<16x512xf32>
    %109 = vector.extract_strided_slice %67 {offsets = [0, 15], sizes = [16, 1], strides = [1, 1]} : vector<16x16xf32> to vector<16x1xf32>
    %110 = vector.extract_strided_slice %66 {offsets = [15, 0], sizes = [1, 512], strides = [1, 1]} : vector<16x512xf32> to vector<1x512xf32>
    %111 = vector.broadcast %109 : vector<16x1xf32> to vector<16x512xf32>
    %112 = vector.broadcast %110 : vector<1x512xf32> to vector<16x512xf32>
    %113 = arith.mulf %111, %112 : vector<16x512xf32>
    %114 = arith.addf %108, %113 : vector<16x512xf32>
    %115 = arith.addf %62, %114 : vector<16x512xf32>
    %c15_i32 = arith.constant 15 : i32
    %116 = tpu.dynamic_rotate %29 by %c15_i32 dim 1 : vector<16x512xf32>, i32 -> vector<16x512xf32>
    %c2 = arith.constant 2 : index
    %c0_11 = arith.constant 0 : index
    %117 = vector.load %arg2[%c2, %c0_11] : memref<8x512xf32, #tpu.memory_space<vmem>>, vector<1x512xf32>
    %118 = vector.broadcast %117 : vector<1x512xf32> to vector<16x512xf32>
    %119 = arith.mulf %116, %118 : vector<16x512xf32>
    %c64 = arith.constant 64 : index
    %c0_12 = arith.constant 0 : index
    %120 = vector.load %arg1[%c64, %c0_12] : memref<176x16xf32, #tpu.memory_space<vmem>>, vector<16x16xf32>
    %121 = vector.extract_strided_slice %120 {offsets = [0, 8], sizes = [16, 1], strides = [1, 1]} : vector<16x16xf32> to vector<16x1xf32>
    %122 = vector.extract_strided_slice %119 {offsets = [8, 0], sizes = [1, 512], strides = [1, 1]} : vector<16x512xf32> to vector<1x512xf32>
    %123 = vector.broadcast %121 : vector<16x1xf32> to vector<16x512xf32>
    %124 = vector.broadcast %122 : vector<1x512xf32> to vector<16x512xf32>
    %125 = arith.mulf %123, %124 : vector<16x512xf32>
    %126 = vector.extract_strided_slice %120 {offsets = [0, 9], sizes = [16, 1], strides = [1, 1]} : vector<16x16xf32> to vector<16x1xf32>
    %127 = vector.extract_strided_slice %119 {offsets = [9, 0], sizes = [1, 512], strides = [1, 1]} : vector<16x512xf32> to vector<1x512xf32>
    %128 = vector.broadcast %126 : vector<16x1xf32> to vector<16x512xf32>
    %129 = vector.broadcast %127 : vector<1x512xf32> to vector<16x512xf32>
    %130 = arith.mulf %128, %129 : vector<16x512xf32>
    %131 = arith.addf %125, %130 : vector<16x512xf32>
    %132 = vector.extract_strided_slice %120 {offsets = [0, 10], sizes = [16, 1], strides = [1, 1]} : vector<16x16xf32> to vector<16x1xf32>
    %133 = vector.extract_strided_slice %119 {offsets = [10, 0], sizes = [1, 512], strides = [1, 1]} : vector<16x512xf32> to vector<1x512xf32>
    %134 = vector.broadcast %132 : vector<16x1xf32> to vector<16x512xf32>
    %135 = vector.broadcast %133 : vector<1x512xf32> to vector<16x512xf32>
    %136 = arith.mulf %134, %135 : vector<16x512xf32>
    %137 = arith.addf %131, %136 : vector<16x512xf32>
    %138 = vector.extract_strided_slice %120 {offsets = [0, 11], sizes = [16, 1], strides = [1, 1]} : vector<16x16xf32> to vector<16x1xf32>
    %139 = vector.extract_strided_slice %119 {offsets = [11, 0], sizes = [1, 512], strides = [1, 1]} : vector<16x512xf32> to vector<1x512xf32>
    %140 = vector.broadcast %138 : vector<16x1xf32> to vector<16x512xf32>
    %141 = vector.broadcast %139 : vector<1x512xf32> to vector<16x512xf32>
    %142 = arith.mulf %140, %141 : vector<16x512xf32>
    %143 = arith.addf %137, %142 : vector<16x512xf32>
    %144 = arith.addf %115, %143 : vector<16x512xf32>
    %c1_i32 = arith.constant 1 : i32
    %145 = tpu.dynamic_rotate %29 by %c1_i32 dim 1 : vector<16x512xf32>, i32 -> vector<16x512xf32>
    %c3 = arith.constant 3 : index
    %c0_13 = arith.constant 0 : index
    %146 = vector.load %arg2[%c3, %c0_13] : memref<8x512xf32, #tpu.memory_space<vmem>>, vector<1x512xf32>
    %147 = vector.broadcast %146 : vector<1x512xf32> to vector<16x512xf32>
    %148 = arith.mulf %145, %147 : vector<16x512xf32>
    %c80 = arith.constant 80 : index
    %c0_14 = arith.constant 0 : index
    %149 = vector.load %arg1[%c80, %c0_14] : memref<176x16xf32, #tpu.memory_space<vmem>>, vector<16x16xf32>
    %150 = vector.extract_strided_slice %149 {offsets = [0, 4], sizes = [16, 1], strides = [1, 1]} : vector<16x16xf32> to vector<16x1xf32>
    %151 = vector.extract_strided_slice %148 {offsets = [4, 0], sizes = [1, 512], strides = [1, 1]} : vector<16x512xf32> to vector<1x512xf32>
    %152 = vector.broadcast %150 : vector<16x1xf32> to vector<16x512xf32>
    %153 = vector.broadcast %151 : vector<1x512xf32> to vector<16x512xf32>
    %154 = arith.mulf %152, %153 : vector<16x512xf32>
    %155 = vector.extract_strided_slice %149 {offsets = [0, 5], sizes = [16, 1], strides = [1, 1]} : vector<16x16xf32> to vector<16x1xf32>
    %156 = vector.extract_strided_slice %148 {offsets = [5, 0], sizes = [1, 512], strides = [1, 1]} : vector<16x512xf32> to vector<1x512xf32>
    %157 = vector.broadcast %155 : vector<16x1xf32> to vector<16x512xf32>
    %158 = vector.broadcast %156 : vector<1x512xf32> to vector<16x512xf32>
    %159 = arith.mulf %157, %158 : vector<16x512xf32>
    %160 = arith.addf %154, %159 : vector<16x512xf32>
    %161 = vector.extract_strided_slice %149 {offsets = [0, 6], sizes = [16, 1], strides = [1, 1]} : vector<16x16xf32> to vector<16x1xf32>
    %162 = vector.extract_strided_slice %148 {offsets = [6, 0], sizes = [1, 512], strides = [1, 1]} : vector<16x512xf32> to vector<1x512xf32>
    %163 = vector.broadcast %161 : vector<16x1xf32> to vector<16x512xf32>
    %164 = vector.broadcast %162 : vector<1x512xf32> to vector<16x512xf32>
    %165 = arith.mulf %163, %164 : vector<16x512xf32>
    %166 = arith.addf %160, %165 : vector<16x512xf32>
    %167 = vector.extract_strided_slice %149 {offsets = [0, 7], sizes = [16, 1], strides = [1, 1]} : vector<16x16xf32> to vector<16x1xf32>
    %168 = vector.extract_strided_slice %148 {offsets = [7, 0], sizes = [1, 512], strides = [1, 1]} : vector<16x512xf32> to vector<1x512xf32>
    %169 = vector.broadcast %167 : vector<16x1xf32> to vector<16x512xf32>
    %170 = vector.broadcast %168 : vector<1x512xf32> to vector<16x512xf32>
    %171 = arith.mulf %169, %170 : vector<16x512xf32>
    %172 = arith.addf %166, %171 : vector<16x512xf32>
    %173 = vector.extract_strided_slice %149 {offsets = [0, 12], sizes = [16, 1], strides = [1, 1]} : vector<16x16xf32> to vector<16x1xf32>
    %174 = vector.extract_strided_slice %148 {offsets = [12, 0], sizes = [1, 512], strides = [1, 1]} : vector<16x512xf32> to vector<1x512xf32>
    %175 = vector.broadcast %173 : vector<16x1xf32> to vector<16x512xf32>
    %176 = vector.broadcast %174 : vector<1x512xf32> to vector<16x512xf32>
    %177 = arith.mulf %175, %176 : vector<16x512xf32>
    %178 = arith.addf %172, %177 : vector<16x512xf32>
    %179 = vector.extract_strided_slice %149 {offsets = [0, 13], sizes = [16, 1], strides = [1, 1]} : vector<16x16xf32> to vector<16x1xf32>
    %180 = vector.extract_strided_slice %148 {offsets = [13, 0], sizes = [1, 512], strides = [1, 1]} : vector<16x512xf32> to vector<1x512xf32>
    %181 = vector.broadcast %179 : vector<16x1xf32> to vector<16x512xf32>
    %182 = vector.broadcast %180 : vector<1x512xf32> to vector<16x512xf32>
    %183 = arith.mulf %181, %182 : vector<16x512xf32>
    %184 = arith.addf %178, %183 : vector<16x512xf32>
    %185 = vector.extract_strided_slice %149 {offsets = [0, 14], sizes = [16, 1], strides = [1, 1]} : vector<16x16xf32> to vector<16x1xf32>
    %186 = vector.extract_strided_slice %148 {offsets = [14, 0], sizes = [1, 512], strides = [1, 1]} : vector<16x512xf32> to vector<1x512xf32>
    %187 = vector.broadcast %185 : vector<16x1xf32> to vector<16x512xf32>
    %188 = vector.broadcast %186 : vector<1x512xf32> to vector<16x512xf32>
    %189 = arith.mulf %187, %188 : vector<16x512xf32>
    %190 = arith.addf %184, %189 : vector<16x512xf32>
    %191 = vector.extract_strided_slice %149 {offsets = [0, 15], sizes = [16, 1], strides = [1, 1]} : vector<16x16xf32> to vector<16x1xf32>
    %192 = vector.extract_strided_slice %148 {offsets = [15, 0], sizes = [1, 512], strides = [1, 1]} : vector<16x512xf32> to vector<1x512xf32>
    %193 = vector.broadcast %191 : vector<16x1xf32> to vector<16x512xf32>
    %194 = vector.broadcast %192 : vector<1x512xf32> to vector<16x512xf32>
    %195 = arith.mulf %193, %194 : vector<16x512xf32>
    %196 = arith.addf %190, %195 : vector<16x512xf32>
    %197 = arith.addf %144, %196 : vector<16x512xf32>
    %c96 = arith.constant 96 : index
    %c0_15 = arith.constant 0 : index
    %198 = vector.load %arg1[%c96, %c0_15] : memref<176x16xf32, #tpu.memory_space<vmem>>, vector<16x16xf32>
    %199 = vector.extract_strided_slice %198 {offsets = [0, 0], sizes = [16, 1], strides = [1, 1]} : vector<16x16xf32> to vector<16x1xf32>
    %200 = vector.extract_strided_slice %29 {offsets = [0, 0], sizes = [1, 512], strides = [1, 1]} : vector<16x512xf32> to vector<1x512xf32>
    %201 = vector.broadcast %199 : vector<16x1xf32> to vector<16x512xf32>
    %202 = vector.broadcast %200 : vector<1x512xf32> to vector<16x512xf32>
    %203 = arith.mulf %201, %202 : vector<16x512xf32>
    %204 = vector.extract_strided_slice %198 {offsets = [0, 1], sizes = [16, 1], strides = [1, 1]} : vector<16x16xf32> to vector<16x1xf32>
    %205 = vector.extract_strided_slice %29 {offsets = [1, 0], sizes = [1, 512], strides = [1, 1]} : vector<16x512xf32> to vector<1x512xf32>
    %206 = vector.broadcast %204 : vector<16x1xf32> to vector<16x512xf32>
    %207 = vector.broadcast %205 : vector<1x512xf32> to vector<16x512xf32>
    %208 = arith.mulf %206, %207 : vector<16x512xf32>
    %209 = arith.addf %203, %208 : vector<16x512xf32>
    %210 = vector.extract_strided_slice %198 {offsets = [0, 2], sizes = [16, 1], strides = [1, 1]} : vector<16x16xf32> to vector<16x1xf32>
    %211 = vector.extract_strided_slice %29 {offsets = [2, 0], sizes = [1, 512], strides = [1, 1]} : vector<16x512xf32> to vector<1x512xf32>
    %212 = vector.broadcast %210 : vector<16x1xf32> to vector<16x512xf32>
    %213 = vector.broadcast %211 : vector<1x512xf32> to vector<16x512xf32>
    %214 = arith.mulf %212, %213 : vector<16x512xf32>
    %215 = arith.addf %209, %214 : vector<16x512xf32>
    %216 = vector.extract_strided_slice %198 {offsets = [0, 3], sizes = [16, 1], strides = [1, 1]} : vector<16x16xf32> to vector<16x1xf32>
    %217 = vector.extract_strided_slice %29 {offsets = [3, 0], sizes = [1, 512], strides = [1, 1]} : vector<16x512xf32> to vector<1x512xf32>
    %218 = vector.broadcast %216 : vector<16x1xf32> to vector<16x512xf32>
    %219 = vector.broadcast %217 : vector<1x512xf32> to vector<16x512xf32>
    %220 = arith.mulf %218, %219 : vector<16x512xf32>
    %221 = arith.addf %215, %220 : vector<16x512xf32>
    %222 = vector.extract_strided_slice %198 {offsets = [0, 4], sizes = [16, 1], strides = [1, 1]} : vector<16x16xf32> to vector<16x1xf32>
    %223 = vector.extract_strided_slice %29 {offsets = [4, 0], sizes = [1, 512], strides = [1, 1]} : vector<16x512xf32> to vector<1x512xf32>
    %224 = vector.broadcast %222 : vector<16x1xf32> to vector<16x512xf32>
    %225 = vector.broadcast %223 : vector<1x512xf32> to vector<16x512xf32>
    %226 = arith.mulf %224, %225 : vector<16x512xf32>
    %227 = arith.addf %221, %226 : vector<16x512xf32>
    %228 = vector.extract_strided_slice %198 {offsets = [0, 5], sizes = [16, 1], strides = [1, 1]} : vector<16x16xf32> to vector<16x1xf32>
    %229 = vector.extract_strided_slice %29 {offsets = [5, 0], sizes = [1, 512], strides = [1, 1]} : vector<16x512xf32> to vector<1x512xf32>
    %230 = vector.broadcast %228 : vector<16x1xf32> to vector<16x512xf32>
    %231 = vector.broadcast %229 : vector<1x512xf32> to vector<16x512xf32>
    %232 = arith.mulf %230, %231 : vector<16x512xf32>
    %233 = arith.addf %227, %232 : vector<16x512xf32>
    %234 = vector.extract_strided_slice %198 {offsets = [0, 6], sizes = [16, 1], strides = [1, 1]} : vector<16x16xf32> to vector<16x1xf32>
    %235 = vector.extract_strided_slice %29 {offsets = [6, 0], sizes = [1, 512], strides = [1, 1]} : vector<16x512xf32> to vector<1x512xf32>
    %236 = vector.broadcast %234 : vector<16x1xf32> to vector<16x512xf32>
    %237 = vector.broadcast %235 : vector<1x512xf32> to vector<16x512xf32>
    %238 = arith.mulf %236, %237 : vector<16x512xf32>
    %239 = arith.addf %233, %238 : vector<16x512xf32>
    %240 = vector.extract_strided_slice %198 {offsets = [0, 7], sizes = [16, 1], strides = [1, 1]} : vector<16x16xf32> to vector<16x1xf32>
    %241 = vector.extract_strided_slice %29 {offsets = [7, 0], sizes = [1, 512], strides = [1, 1]} : vector<16x512xf32> to vector<1x512xf32>
    %242 = vector.broadcast %240 : vector<16x1xf32> to vector<16x512xf32>
    %243 = vector.broadcast %241 : vector<1x512xf32> to vector<16x512xf32>
    %244 = arith.mulf %242, %243 : vector<16x512xf32>
    %245 = arith.addf %239, %244 : vector<16x512xf32>
    %246 = vector.extract_strided_slice %198 {offsets = [0, 8], sizes = [16, 1], strides = [1, 1]} : vector<16x16xf32> to vector<16x1xf32>
    %247 = vector.extract_strided_slice %29 {offsets = [8, 0], sizes = [1, 512], strides = [1, 1]} : vector<16x512xf32> to vector<1x512xf32>
    %248 = vector.broadcast %246 : vector<16x1xf32> to vector<16x512xf32>
    %249 = vector.broadcast %247 : vector<1x512xf32> to vector<16x512xf32>
    %250 = arith.mulf %248, %249 : vector<16x512xf32>
    %251 = arith.addf %245, %250 : vector<16x512xf32>
    %252 = vector.extract_strided_slice %198 {offsets = [0, 9], sizes = [16, 1], strides = [1, 1]} : vector<16x16xf32> to vector<16x1xf32>
    %253 = vector.extract_strided_slice %29 {offsets = [9, 0], sizes = [1, 512], strides = [1, 1]} : vector<16x512xf32> to vector<1x512xf32>
    %254 = vector.broadcast %252 : vector<16x1xf32> to vector<16x512xf32>
    %255 = vector.broadcast %253 : vector<1x512xf32> to vector<16x512xf32>
    %256 = arith.mulf %254, %255 : vector<16x512xf32>
    %257 = arith.addf %251, %256 : vector<16x512xf32>
    %258 = vector.extract_strided_slice %198 {offsets = [0, 10], sizes = [16, 1], strides = [1, 1]} : vector<16x16xf32> to vector<16x1xf32>
    %259 = vector.extract_strided_slice %29 {offsets = [10, 0], sizes = [1, 512], strides = [1, 1]} : vector<16x512xf32> to vector<1x512xf32>
    %260 = vector.broadcast %258 : vector<16x1xf32> to vector<16x512xf32>
    %261 = vector.broadcast %259 : vector<1x512xf32> to vector<16x512xf32>
    %262 = arith.mulf %260, %261 : vector<16x512xf32>
    %263 = arith.addf %257, %262 : vector<16x512xf32>
    %264 = vector.extract_strided_slice %198 {offsets = [0, 11], sizes = [16, 1], strides = [1, 1]} : vector<16x16xf32> to vector<16x1xf32>
    %265 = vector.extract_strided_slice %29 {offsets = [11, 0], sizes = [1, 512], strides = [1, 1]} : vector<16x512xf32> to vector<1x512xf32>
    %266 = vector.broadcast %264 : vector<16x1xf32> to vector<16x512xf32>
    %267 = vector.broadcast %265 : vector<1x512xf32> to vector<16x512xf32>
    %268 = arith.mulf %266, %267 : vector<16x512xf32>
    %269 = arith.addf %263, %268 : vector<16x512xf32>
    %270 = vector.extract_strided_slice %198 {offsets = [0, 12], sizes = [16, 1], strides = [1, 1]} : vector<16x16xf32> to vector<16x1xf32>
    %271 = vector.extract_strided_slice %29 {offsets = [12, 0], sizes = [1, 512], strides = [1, 1]} : vector<16x512xf32> to vector<1x512xf32>
    %272 = vector.broadcast %270 : vector<16x1xf32> to vector<16x512xf32>
    %273 = vector.broadcast %271 : vector<1x512xf32> to vector<16x512xf32>
    %274 = arith.mulf %272, %273 : vector<16x512xf32>
    %275 = arith.addf %269, %274 : vector<16x512xf32>
    %276 = vector.extract_strided_slice %198 {offsets = [0, 13], sizes = [16, 1], strides = [1, 1]} : vector<16x16xf32> to vector<16x1xf32>
    %277 = vector.extract_strided_slice %29 {offsets = [13, 0], sizes = [1, 512], strides = [1, 1]} : vector<16x512xf32> to vector<1x512xf32>
    %278 = vector.broadcast %276 : vector<16x1xf32> to vector<16x512xf32>
    %279 = vector.broadcast %277 : vector<1x512xf32> to vector<16x512xf32>
    %280 = arith.mulf %278, %279 : vector<16x512xf32>
    %281 = arith.addf %275, %280 : vector<16x512xf32>
    %282 = vector.extract_strided_slice %198 {offsets = [0, 14], sizes = [16, 1], strides = [1, 1]} : vector<16x16xf32> to vector<16x1xf32>
    %283 = vector.extract_strided_slice %29 {offsets = [14, 0], sizes = [1, 512], strides = [1, 1]} : vector<16x512xf32> to vector<1x512xf32>
    %284 = vector.broadcast %282 : vector<16x1xf32> to vector<16x512xf32>
    %285 = vector.broadcast %283 : vector<1x512xf32> to vector<16x512xf32>
    %286 = arith.mulf %284, %285 : vector<16x512xf32>
    %287 = arith.addf %281, %286 : vector<16x512xf32>
    %288 = vector.extract_strided_slice %198 {offsets = [0, 15], sizes = [16, 1], strides = [1, 1]} : vector<16x16xf32> to vector<16x1xf32>
    %289 = vector.extract_strided_slice %29 {offsets = [15, 0], sizes = [1, 512], strides = [1, 1]} : vector<16x512xf32> to vector<1x512xf32>
    %290 = vector.broadcast %288 : vector<16x1xf32> to vector<16x512xf32>
    %291 = vector.broadcast %289 : vector<1x512xf32> to vector<16x512xf32>
    %292 = arith.mulf %290, %291 : vector<16x512xf32>
    %293 = arith.addf %287, %292 : vector<16x512xf32>
    %294 = arith.addf %197, %293 : vector<16x512xf32>
    %c511_i32 = arith.constant 511 : i32
    %295 = tpu.dynamic_rotate %29 by %c511_i32 dim 1 : vector<16x512xf32>, i32 -> vector<16x512xf32>
    %c4 = arith.constant 4 : index
    %c0_16 = arith.constant 0 : index
    %296 = vector.load %arg2[%c4, %c0_16] : memref<8x512xf32, #tpu.memory_space<vmem>>, vector<1x512xf32>
    %297 = vector.broadcast %296 : vector<1x512xf32> to vector<16x512xf32>
    %298 = arith.mulf %295, %297 : vector<16x512xf32>
    %c112 = arith.constant 112 : index
    %c0_17 = arith.constant 0 : index
    %299 = vector.load %arg1[%c112, %c0_17] : memref<176x16xf32, #tpu.memory_space<vmem>>, vector<16x16xf32>
    %300 = vector.extract_strided_slice %299 {offsets = [0, 0], sizes = [16, 1], strides = [1, 1]} : vector<16x16xf32> to vector<16x1xf32>
    %301 = vector.extract_strided_slice %298 {offsets = [0, 0], sizes = [1, 512], strides = [1, 1]} : vector<16x512xf32> to vector<1x512xf32>
    %302 = vector.broadcast %300 : vector<16x1xf32> to vector<16x512xf32>
    %303 = vector.broadcast %301 : vector<1x512xf32> to vector<16x512xf32>
    %304 = arith.mulf %302, %303 : vector<16x512xf32>
    %305 = vector.extract_strided_slice %299 {offsets = [0, 1], sizes = [16, 1], strides = [1, 1]} : vector<16x16xf32> to vector<16x1xf32>
    %306 = vector.extract_strided_slice %298 {offsets = [1, 0], sizes = [1, 512], strides = [1, 1]} : vector<16x512xf32> to vector<1x512xf32>
    %307 = vector.broadcast %305 : vector<16x1xf32> to vector<16x512xf32>
    %308 = vector.broadcast %306 : vector<1x512xf32> to vector<16x512xf32>
    %309 = arith.mulf %307, %308 : vector<16x512xf32>
    %310 = arith.addf %304, %309 : vector<16x512xf32>
    %311 = vector.extract_strided_slice %299 {offsets = [0, 2], sizes = [16, 1], strides = [1, 1]} : vector<16x16xf32> to vector<16x1xf32>
    %312 = vector.extract_strided_slice %298 {offsets = [2, 0], sizes = [1, 512], strides = [1, 1]} : vector<16x512xf32> to vector<1x512xf32>
    %313 = vector.broadcast %311 : vector<16x1xf32> to vector<16x512xf32>
    %314 = vector.broadcast %312 : vector<1x512xf32> to vector<16x512xf32>
    %315 = arith.mulf %313, %314 : vector<16x512xf32>
    %316 = arith.addf %310, %315 : vector<16x512xf32>
    %317 = vector.extract_strided_slice %299 {offsets = [0, 3], sizes = [16, 1], strides = [1, 1]} : vector<16x16xf32> to vector<16x1xf32>
    %318 = vector.extract_strided_slice %298 {offsets = [3, 0], sizes = [1, 512], strides = [1, 1]} : vector<16x512xf32> to vector<1x512xf32>
    %319 = vector.broadcast %317 : vector<16x1xf32> to vector<16x512xf32>
    %320 = vector.broadcast %318 : vector<1x512xf32> to vector<16x512xf32>
    %321 = arith.mulf %319, %320 : vector<16x512xf32>
    %322 = arith.addf %316, %321 : vector<16x512xf32>
    %323 = vector.extract_strided_slice %299 {offsets = [0, 8], sizes = [16, 1], strides = [1, 1]} : vector<16x16xf32> to vector<16x1xf32>
    %324 = vector.extract_strided_slice %298 {offsets = [8, 0], sizes = [1, 512], strides = [1, 1]} : vector<16x512xf32> to vector<1x512xf32>
    %325 = vector.broadcast %323 : vector<16x1xf32> to vector<16x512xf32>
    %326 = vector.broadcast %324 : vector<1x512xf32> to vector<16x512xf32>
    %327 = arith.mulf %325, %326 : vector<16x512xf32>
    %328 = arith.addf %322, %327 : vector<16x512xf32>
    %329 = vector.extract_strided_slice %299 {offsets = [0, 9], sizes = [16, 1], strides = [1, 1]} : vector<16x16xf32> to vector<16x1xf32>
    %330 = vector.extract_strided_slice %298 {offsets = [9, 0], sizes = [1, 512], strides = [1, 1]} : vector<16x512xf32> to vector<1x512xf32>
    %331 = vector.broadcast %329 : vector<16x1xf32> to vector<16x512xf32>
    %332 = vector.broadcast %330 : vector<1x512xf32> to vector<16x512xf32>
    %333 = arith.mulf %331, %332 : vector<16x512xf32>
    %334 = arith.addf %328, %333 : vector<16x512xf32>
    %335 = vector.extract_strided_slice %299 {offsets = [0, 10], sizes = [16, 1], strides = [1, 1]} : vector<16x16xf32> to vector<16x1xf32>
    %336 = vector.extract_strided_slice %298 {offsets = [10, 0], sizes = [1, 512], strides = [1, 1]} : vector<16x512xf32> to vector<1x512xf32>
    %337 = vector.broadcast %335 : vector<16x1xf32> to vector<16x512xf32>
    %338 = vector.broadcast %336 : vector<1x512xf32> to vector<16x512xf32>
    %339 = arith.mulf %337, %338 : vector<16x512xf32>
    %340 = arith.addf %334, %339 : vector<16x512xf32>
    %341 = vector.extract_strided_slice %299 {offsets = [0, 11], sizes = [16, 1], strides = [1, 1]} : vector<16x16xf32> to vector<16x1xf32>
    %342 = vector.extract_strided_slice %298 {offsets = [11, 0], sizes = [1, 512], strides = [1, 1]} : vector<16x512xf32> to vector<1x512xf32>
    %343 = vector.broadcast %341 : vector<16x1xf32> to vector<16x512xf32>
    %344 = vector.broadcast %342 : vector<1x512xf32> to vector<16x512xf32>
    %345 = arith.mulf %343, %344 : vector<16x512xf32>
    %346 = arith.addf %340, %345 : vector<16x512xf32>
    %347 = arith.addf %294, %346 : vector<16x512xf32>
    %c497_i32 = arith.constant 497 : i32
    %348 = tpu.dynamic_rotate %29 by %c497_i32 dim 1 : vector<16x512xf32>, i32 -> vector<16x512xf32>
    %c5 = arith.constant 5 : index
    %c0_18 = arith.constant 0 : index
    %349 = vector.load %arg2[%c5, %c0_18] : memref<8x512xf32, #tpu.memory_space<vmem>>, vector<1x512xf32>
    %350 = vector.broadcast %349 : vector<1x512xf32> to vector<16x512xf32>
    %351 = arith.mulf %348, %350 : vector<16x512xf32>
    %c128 = arith.constant 128 : index
    %c0_19 = arith.constant 0 : index
    %352 = vector.load %arg1[%c128, %c0_19] : memref<176x16xf32, #tpu.memory_space<vmem>>, vector<16x16xf32>
    %353 = vector.extract_strided_slice %352 {offsets = [0, 4], sizes = [16, 1], strides = [1, 1]} : vector<16x16xf32> to vector<16x1xf32>
    %354 = vector.extract_strided_slice %351 {offsets = [4, 0], sizes = [1, 512], strides = [1, 1]} : vector<16x512xf32> to vector<1x512xf32>
    %355 = vector.broadcast %353 : vector<16x1xf32> to vector<16x512xf32>
    %356 = vector.broadcast %354 : vector<1x512xf32> to vector<16x512xf32>
    %357 = arith.mulf %355, %356 : vector<16x512xf32>
    %358 = vector.extract_strided_slice %352 {offsets = [0, 5], sizes = [16, 1], strides = [1, 1]} : vector<16x16xf32> to vector<16x1xf32>
    %359 = vector.extract_strided_slice %351 {offsets = [5, 0], sizes = [1, 512], strides = [1, 1]} : vector<16x512xf32> to vector<1x512xf32>
    %360 = vector.broadcast %358 : vector<16x1xf32> to vector<16x512xf32>
    %361 = vector.broadcast %359 : vector<1x512xf32> to vector<16x512xf32>
    %362 = arith.mulf %360, %361 : vector<16x512xf32>
    %363 = arith.addf %357, %362 : vector<16x512xf32>
    %364 = vector.extract_strided_slice %352 {offsets = [0, 6], sizes = [16, 1], strides = [1, 1]} : vector<16x16xf32> to vector<16x1xf32>
    %365 = vector.extract_strided_slice %351 {offsets = [6, 0], sizes = [1, 512], strides = [1, 1]} : vector<16x512xf32> to vector<1x512xf32>
    %366 = vector.broadcast %364 : vector<16x1xf32> to vector<16x512xf32>
    %367 = vector.broadcast %365 : vector<1x512xf32> to vector<16x512xf32>
    %368 = arith.mulf %366, %367 : vector<16x512xf32>
    %369 = arith.addf %363, %368 : vector<16x512xf32>
    %370 = vector.extract_strided_slice %352 {offsets = [0, 7], sizes = [16, 1], strides = [1, 1]} : vector<16x16xf32> to vector<16x1xf32>
    %371 = vector.extract_strided_slice %351 {offsets = [7, 0], sizes = [1, 512], strides = [1, 1]} : vector<16x512xf32> to vector<1x512xf32>
    %372 = vector.broadcast %370 : vector<16x1xf32> to vector<16x512xf32>
    %373 = vector.broadcast %371 : vector<1x512xf32> to vector<16x512xf32>
    %374 = arith.mulf %372, %373 : vector<16x512xf32>
    %375 = arith.addf %369, %374 : vector<16x512xf32>
    %376 = arith.addf %347, %375 : vector<16x512xf32>
    %c496_i32 = arith.constant 496 : i32
    %377 = tpu.dynamic_rotate %29 by %c496_i32 dim 1 : vector<16x512xf32>, i32 -> vector<16x512xf32>
    %c6 = arith.constant 6 : index
    %c0_20 = arith.constant 0 : index
    %378 = vector.load %arg2[%c6, %c0_20] : memref<8x512xf32, #tpu.memory_space<vmem>>, vector<1x512xf32>
    %379 = vector.broadcast %378 : vector<1x512xf32> to vector<16x512xf32>
    %380 = arith.mulf %377, %379 : vector<16x512xf32>
    %c144 = arith.constant 144 : index
    %c0_21 = arith.constant 0 : index
    %381 = vector.load %arg1[%c144, %c0_21] : memref<176x16xf32, #tpu.memory_space<vmem>>, vector<16x16xf32>
    %382 = vector.extract_strided_slice %381 {offsets = [0, 0], sizes = [16, 1], strides = [1, 1]} : vector<16x16xf32> to vector<16x1xf32>
    %383 = vector.extract_strided_slice %380 {offsets = [0, 0], sizes = [1, 512], strides = [1, 1]} : vector<16x512xf32> to vector<1x512xf32>
    %384 = vector.broadcast %382 : vector<16x1xf32> to vector<16x512xf32>
    %385 = vector.broadcast %383 : vector<1x512xf32> to vector<16x512xf32>
    %386 = arith.mulf %384, %385 : vector<16x512xf32>
    %387 = vector.extract_strided_slice %381 {offsets = [0, 1], sizes = [16, 1], strides = [1, 1]} : vector<16x16xf32> to vector<16x1xf32>
    %388 = vector.extract_strided_slice %380 {offsets = [1, 0], sizes = [1, 512], strides = [1, 1]} : vector<16x512xf32> to vector<1x512xf32>
    %389 = vector.broadcast %387 : vector<16x1xf32> to vector<16x512xf32>
    %390 = vector.broadcast %388 : vector<1x512xf32> to vector<16x512xf32>
    %391 = arith.mulf %389, %390 : vector<16x512xf32>
    %392 = arith.addf %386, %391 : vector<16x512xf32>
    %393 = vector.extract_strided_slice %381 {offsets = [0, 2], sizes = [16, 1], strides = [1, 1]} : vector<16x16xf32> to vector<16x1xf32>
    %394 = vector.extract_strided_slice %380 {offsets = [2, 0], sizes = [1, 512], strides = [1, 1]} : vector<16x512xf32> to vector<1x512xf32>
    %395 = vector.broadcast %393 : vector<16x1xf32> to vector<16x512xf32>
    %396 = vector.broadcast %394 : vector<1x512xf32> to vector<16x512xf32>
    %397 = arith.mulf %395, %396 : vector<16x512xf32>
    %398 = arith.addf %392, %397 : vector<16x512xf32>
    %399 = vector.extract_strided_slice %381 {offsets = [0, 3], sizes = [16, 1], strides = [1, 1]} : vector<16x16xf32> to vector<16x1xf32>
    %400 = vector.extract_strided_slice %380 {offsets = [3, 0], sizes = [1, 512], strides = [1, 1]} : vector<16x512xf32> to vector<1x512xf32>
    %401 = vector.broadcast %399 : vector<16x1xf32> to vector<16x512xf32>
    %402 = vector.broadcast %400 : vector<1x512xf32> to vector<16x512xf32>
    %403 = arith.mulf %401, %402 : vector<16x512xf32>
    %404 = arith.addf %398, %403 : vector<16x512xf32>
    %405 = vector.extract_strided_slice %381 {offsets = [0, 4], sizes = [16, 1], strides = [1, 1]} : vector<16x16xf32> to vector<16x1xf32>
    %406 = vector.extract_strided_slice %380 {offsets = [4, 0], sizes = [1, 512], strides = [1, 1]} : vector<16x512xf32> to vector<1x512xf32>
    %407 = vector.broadcast %405 : vector<16x1xf32> to vector<16x512xf32>
    %408 = vector.broadcast %406 : vector<1x512xf32> to vector<16x512xf32>
    %409 = arith.mulf %407, %408 : vector<16x512xf32>
    %410 = arith.addf %404, %409 : vector<16x512xf32>
    %411 = vector.extract_strided_slice %381 {offsets = [0, 5], sizes = [16, 1], strides = [1, 1]} : vector<16x16xf32> to vector<16x1xf32>
    %412 = vector.extract_strided_slice %380 {offsets = [5, 0], sizes = [1, 512], strides = [1, 1]} : vector<16x512xf32> to vector<1x512xf32>
    %413 = vector.broadcast %411 : vector<16x1xf32> to vector<16x512xf32>
    %414 = vector.broadcast %412 : vector<1x512xf32> to vector<16x512xf32>
    %415 = arith.mulf %413, %414 : vector<16x512xf32>
    %416 = arith.addf %410, %415 : vector<16x512xf32>
    %417 = vector.extract_strided_slice %381 {offsets = [0, 6], sizes = [16, 1], strides = [1, 1]} : vector<16x16xf32> to vector<16x1xf32>
    %418 = vector.extract_strided_slice %380 {offsets = [6, 0], sizes = [1, 512], strides = [1, 1]} : vector<16x512xf32> to vector<1x512xf32>
    %419 = vector.broadcast %417 : vector<16x1xf32> to vector<16x512xf32>
    %420 = vector.broadcast %418 : vector<1x512xf32> to vector<16x512xf32>
    %421 = arith.mulf %419, %420 : vector<16x512xf32>
    %422 = arith.addf %416, %421 : vector<16x512xf32>
    %423 = vector.extract_strided_slice %381 {offsets = [0, 7], sizes = [16, 1], strides = [1, 1]} : vector<16x16xf32> to vector<16x1xf32>
    %424 = vector.extract_strided_slice %380 {offsets = [7, 0], sizes = [1, 512], strides = [1, 1]} : vector<16x512xf32> to vector<1x512xf32>
    %425 = vector.broadcast %423 : vector<16x1xf32> to vector<16x512xf32>
    %426 = vector.broadcast %424 : vector<1x512xf32> to vector<16x512xf32>
    %427 = arith.mulf %425, %426 : vector<16x512xf32>
    %428 = arith.addf %422, %427 : vector<16x512xf32>
    %429 = arith.addf %376, %428 : vector<16x512xf32>
    %c495_i32 = arith.constant 495 : i32
    %430 = tpu.dynamic_rotate %29 by %c495_i32 dim 1 : vector<16x512xf32>, i32 -> vector<16x512xf32>
    %c7 = arith.constant 7 : index
    %c0_22 = arith.constant 0 : index
    %431 = vector.load %arg2[%c7, %c0_22] : memref<8x512xf32, #tpu.memory_space<vmem>>, vector<1x512xf32>
    %432 = vector.broadcast %431 : vector<1x512xf32> to vector<16x512xf32>
    %433 = arith.mulf %430, %432 : vector<16x512xf32>
    %c160 = arith.constant 160 : index
    %c0_23 = arith.constant 0 : index
    %434 = vector.load %arg1[%c160, %c0_23] : memref<176x16xf32, #tpu.memory_space<vmem>>, vector<16x16xf32>
    %435 = vector.extract_strided_slice %434 {offsets = [0, 0], sizes = [16, 1], strides = [1, 1]} : vector<16x16xf32> to vector<16x1xf32>
    %436 = vector.extract_strided_slice %433 {offsets = [0, 0], sizes = [1, 512], strides = [1, 1]} : vector<16x512xf32> to vector<1x512xf32>
    %437 = vector.broadcast %435 : vector<16x1xf32> to vector<16x512xf32>
    %438 = vector.broadcast %436 : vector<1x512xf32> to vector<16x512xf32>
    %439 = arith.mulf %437, %438 : vector<16x512xf32>
    %440 = vector.extract_strided_slice %434 {offsets = [0, 1], sizes = [16, 1], strides = [1, 1]} : vector<16x16xf32> to vector<16x1xf32>
    %441 = vector.extract_strided_slice %433 {offsets = [1, 0], sizes = [1, 512], strides = [1, 1]} : vector<16x512xf32> to vector<1x512xf32>
    %442 = vector.broadcast %440 : vector<16x1xf32> to vector<16x512xf32>
    %443 = vector.broadcast %441 : vector<1x512xf32> to vector<16x512xf32>
    %444 = arith.mulf %442, %443 : vector<16x512xf32>
    %445 = arith.addf %439, %444 : vector<16x512xf32>
    %446 = vector.extract_strided_slice %434 {offsets = [0, 2], sizes = [16, 1], strides = [1, 1]} : vector<16x16xf32> to vector<16x1xf32>
    %447 = vector.extract_strided_slice %433 {offsets = [2, 0], sizes = [1, 512], strides = [1, 1]} : vector<16x512xf32> to vector<1x512xf32>
    %448 = vector.broadcast %446 : vector<16x1xf32> to vector<16x512xf32>
    %449 = vector.broadcast %447 : vector<1x512xf32> to vector<16x512xf32>
    %450 = arith.mulf %448, %449 : vector<16x512xf32>
    %451 = arith.addf %445, %450 : vector<16x512xf32>
    %452 = vector.extract_strided_slice %434 {offsets = [0, 3], sizes = [16, 1], strides = [1, 1]} : vector<16x16xf32> to vector<16x1xf32>
    %453 = vector.extract_strided_slice %433 {offsets = [3, 0], sizes = [1, 512], strides = [1, 1]} : vector<16x512xf32> to vector<1x512xf32>
    %454 = vector.broadcast %452 : vector<16x1xf32> to vector<16x512xf32>
    %455 = vector.broadcast %453 : vector<1x512xf32> to vector<16x512xf32>
    %456 = arith.mulf %454, %455 : vector<16x512xf32>
    %457 = arith.addf %451, %456 : vector<16x512xf32>
    %458 = arith.addf %429, %457 : vector<16x512xf32>
    %c0_24 = arith.constant 0 : index
    %c0_25 = arith.constant 0 : index
    %459 = vector.load %arg4[%c0_24, %c0_25] : memref<16x512xf32, #tpu.memory_space<vmem>>, vector<16x512xf32>
    tpu.vector_store %arg4[%c0_24, %c0_25], %458 {strides = array<i32>} : memref<16x512xf32, #tpu.memory_space<vmem>>, vector<16x512xf32>,
    return
  }
  func.func @transform_0(%arg0: i32) -> (i32, i32) {
    %c0_i32 = arith.constant 0 : i32
    %c0_i32_0 = arith.constant 0 : i32
    %c0_i32_1 = arith.constant 0 : i32
    return %c0_i32, %c0_i32_0 : i32, i32
  }
  func.func @transform_1(%arg0: i32) -> (i32, i32) {
    %c0_i32 = arith.constant 0 : i32
    %c0_i32_0 = arith.constant 0 : i32
    %c0_i32_1 = arith.constant 0 : i32
    return %c0_i32, %c0_i32_0 : i32, i32
  }
  func.func @transform_2(%arg0: i32) -> (i32, i32) {
    %c0_i32 = arith.constant 0 : i32
    %c0_i32_0 = arith.constant 0 : i32
    %c0_i32_1 = arith.constant 0 : i32
    return %c0_i32, %c0_i32_0 : i32, i32
  }
  func.func @transform_3(%arg0: i32) -> (i32, i32) {
    %c0_i32 = arith.constant 0 : i32
    %c0_i32_0 = arith.constant 0 : i32
    %c0_i32_1 = arith.constant 0 : i32
    return %c0_i32, %c0_i32_0 : i32, i32
  }
}

</mosaic_0001>

<llo_original>
// kernel: tpu_custom_call.1
$region0: #{tpu_custom_call.1}
  #allocation0 [shape = 'u32[]', space=smem, size = 0x4, offset = 0x4, fixed_abs, tag = 'smem constant byte address 0x4 - core index']
  #allocation1 [shape = 'u32[72,128]{1,0:T(1,128)}', space=vmem, size = 0x9000, scoped, tag = 'internal scratch']
  %s0 = inlined_call_operand.vmem [shape: f32[176,16], index: 0, kind: input, shape index: {}]
  %s1 = inlined_call_operand.vmem [shape: f32[8,512], index: 1, kind: input, shape index: {}]
  %s2 = inlined_call_operand.vmem [shape: f32[4,512], index: 2, kind: input, shape index: {}]
  %s3 = inlined_call_operand.hbm [shape: f32[16,512], index: 3, kind: output, shape index: {}]
  %s4 = sld [smem:[#allocation0]]
  $region22: #{tpu_custom_call.1} parent=0
    _
  %s6 = ssub.s32 1, %s4
  %s7 = scalar_select 0, %s6, %s4
  $region1: #{tpu_custom_call.1} parent=0
    #allocation2 [shape = 'u8[32768]{0}', space=vmem, size = 0x8000, scoped, tag = 'output window, operand 0, single buffered']
    #allocation3 [shape = 's32[1]{0}', space=sflag, size = 0x4, scoped, tag = 'scoped memory for tpu_custom_call.1']
    %8 = vsyncpa [#allocation3], 0
    // Predicated region
    $region2: #{tpu_custom_call.1} parent=1 // pred_check
      _
    $region3: #{tpu_custom_call.1} parent=1 // pred_check_branch
      %10 = sbr.rel (0) target = $region5
    $region4: #{tpu_custom_call.1} parent=1 // pred_region
      _
    $region5: #{tpu_custom_call.1} parent=1 // pred_fallthru
      _
    // Predicated region
    $region6: #{tpu_custom_call.1} parent=1 // pred_check
      _
    $region7: #{tpu_custom_call.1} parent=1 // pred_check_branch
      %12 = sbr.rel (0) target = $region9
    $region8: #{tpu_custom_call.1} parent=1 // pred_region
      _
    $region9: #{tpu_custom_call.1} parent=1 // pred_fallthru
      _
    // Predicated region
    $region10: #{tpu_custom_call.1} parent=1 // pred_check
      _
    $region11: #{tpu_custom_call.1} parent=1 // pred_check_branch
      %14 = sbr.rel (0) target = $region13
    $region12: #{tpu_custom_call.1} parent=1 // pred_region
      _
    $region13: #{tpu_custom_call.1} parent=1 // pred_fallthru
      _
    %v15 = vld [vmem:[%s2] sm:$0xff]
    %v16 = vld [vmem:[%s2 + $0x8] sm:$0xff]
    %v17 = vld [vmem:[%s0] sm:$0xff]
    %v18 = vld [vmem:[%s0 + $0x8] sm:$0xff]
    %20 = vset.pattern.permute.xlu0 0
    %21 = vperm.xlu0 %20, %v17
    %v22 = vpop.permute.xlu0 %21
    %25 = vset.pattern.permute.xlu0 0
    %26 = vperm.xlu0 %25, %v18
    %v27 = vpop.permute.xlu0 %26
    %v31 = vperm.slane %v15, 0
    %v32 = vperm.slane %v15, 4
    %v33 = vperm.slane %v16, 0
    %v34 = vperm.slane %v16, 4
    %v39 = vperm.slane %v31, 0
    %v40 = vperm.slane %v32, 0
    %v41 = vperm.slane %v33, 0
    %v42 = vperm.slane %v34, 0
    %v43 = vmul.f32 %v22, %v39
    %v44 = vmul.f32 %v22, %v40
    %v45 = vmul.f32 %v22, %v41
    %v46 = vmul.f32 %v22, %v42
    %v47 = vmul.f32 %v27, %v39
    %v48 = vmul.f32 %v27, %v40
    %v49 = vmul.f32 %v27, %v41
    %v50 = vmul.f32 %v27, %v42
    %51 = vset.pattern.permute.xlu0 1
    %52 = vperm.xlu0 %51, %v17
    %v53 = vpop.permute.xlu0 %52
    %55 = vset.pattern.permute.xlu0 1
    %56 = vperm.xlu0 %55, %v18
    %v57 = vpop.permute.xlu0 %56
    %v59 = vperm.slane %v15, 1
    %v60 = vperm.slane %v15, 5
    %v61 = vperm.slane %v16, 1
    %v62 = vperm.slane %v16, 5
    %v67 = vperm.slane %v59, 1
    %v68 = vperm.slane %v60, 1
    %v69 = vperm.slane %v61, 1
    %v70 = vperm.slane %v62, 1
    %v71 = vmul.f32 %v53, %v67
    %v72 = vmul.f32 %v53, %v68
    %v73 = vmul.f32 %v53, %v69
    %v74 = vmul.f32 %v53, %v70
    %v75 = vmul.f32 %v57, %v67
    %v76 = vmul.f32 %v57, %v68
    %v77 = vmul.f32 %v57, %v69
    %v78 = vmul.f32 %v57, %v70
    %v79 = vadd.f32 %v43, %v71
    %v80 = vadd.f32 %v44, %v72
    %v81 = vadd.f32 %v45, %v73
    %v82 = vadd.f32 %v46, %v74
    %v83 = vadd.f32 %v47, %v75
    %v84 = vadd.f32 %v48, %v76
    %v85 = vadd.f32 %v49, %v77
    %v86 = vadd.f32 %v50, %v78
    %87 = vset.pattern.permute.xlu0 2
    %88 = vperm.xlu0 %87, %v17
    %v89 = vpop.permute.xlu0 %88
    %91 = vset.pattern.permute.xlu0 2
    %92 = vperm.xlu0 %91, %v18
    %v93 = vpop.permute.xlu0 %92
    %v95 = vperm.slane %v15, 2
    %v96 = vperm.slane %v15, 6
    %v97 = vperm.slane %v16, 2
    %v98 = vperm.slane %v16, 6
    %v103 = vperm.slane %v95, 2
    %v104 = vperm.slane %v96, 2
    %v105 = vperm.slane %v97, 2
    %v106 = vperm.slane %v98, 2
    %v107 = vmul.f32 %v89, %v103
    %v108 = vmul.f32 %v89, %v104
    %v109 = vmul.f32 %v89, %v105
    %v110 = vmul.f32 %v89, %v106
    %v111 = vmul.f32 %v93, %v103
    %v112 = vmul.f32 %v93, %v104
    %v113 = vmul.f32 %v93, %v105
    %v114 = vmul.f32 %v93, %v106
    %v115 = vadd.f32 %v79, %v107
    %v116 = vadd.f32 %v80, %v108
    %v117 = vadd.f32 %v81, %v109
    %v118 = vadd.f32 %v82, %v110
    %v119 = vadd.f32 %v83, %v111
    %v120 = vadd.f32 %v84, %v112
    %v121 = vadd.f32 %v85, %v113
    %v122 = vadd.f32 %v86, %v114
    %123 = vset.pattern.permute.xlu0 3
    %124 = vperm.xlu0 %123, %v17
    %v125 = vpop.permute.xlu0 %124
    %127 = vset.pattern.permute.xlu0 3
    %128 = vperm.xlu0 %127, %v18
    %v129 = vpop.permute.xlu0 %128
    %v131 = vperm.slane %v15, 3
    %v132 = vperm.slane %v15, 7
    %v133 = vperm.slane %v16, 3
    %v134 = vperm.slane %v16, 7
    %v139 = vperm.slane %v131, 3
    %v140 = vperm.slane %v132, 3
    %v141 = vperm.slane %v133, 3
    %v142 = vperm.slane %v134, 3
    %v143 = vmul.f32 %v125, %v139
    %v144 = vmul.f32 %v125, %v140
    %v145 = vmul.f32 %v125, %v141
    %v146 = vmul.f32 %v125, %v142
    %v147 = vmul.f32 %v129, %v139
    %v148 = vmul.f32 %v129, %v140
    %v149 = vmul.f32 %v129, %v141
    %v150 = vmul.f32 %v129, %v142
    %v151 = vadd.f32 %v115, %v143
    %v152 = vadd.f32 %v116, %v144
    %v153 = vadd.f32 %v117, %v145
    %v154 = vadd.f32 %v118, %v146
    %v155 = vadd.f32 %v119, %v147
    %v156 = vadd.f32 %v120, %v148
    %v157 = vadd.f32 %v121, %v149
    %v158 = vadd.f32 %v122, %v150
    %v159 = vld [vmem:[%s0 + $0x10] sm:$0xff]
    %v160 = vld [vmem:[%s0 + $0x18] sm:$0xff]
    %162 = vset.pattern.permute.xlu0 0
    %163 = vperm.xlu0 %162, %v159
    %v164 = vpop.permute.xlu0 %163
    %167 = vset.pattern.permute.xlu0 0
    %168 = vperm.xlu0 %167, %v160
    %v169 = vpop.permute.xlu0 %168
    %v171 = vadd.f32 %v151, %v164
    %v172 = vadd.f32 %v152, %v164
    %v173 = vadd.f32 %v153, %v164
    %v174 = vadd.f32 %v154, %v164
    %v175 = vadd.f32 %v155, %v169
    %v176 = vadd.f32 %v156, %v169
    %v177 = vadd.f32 %v157, %v169
    %v178 = vadd.f32 %v158, %v169
    %v179 = vmax.f32 %v171, 0.0
    %v180 = vmax.f32 %v172, 0.0
    %v181 = vmax.f32 %v173, 0.0
    %v182 = vmax.f32 %v174, 0.0
    %v183 = vmax.f32 %v175, 0.0
    %v184 = vmax.f32 %v176, 0.0
    %v185 = vmax.f32 %v177, 0.0
    %v186 = vmax.f32 %v178, 0.0
    %187 = vst [vmem:[#allocation1] ss:$2 sm:$0xff] %v15
    %s188 = scalar_lea.vmem [#allocation1], 16
    %189 = vst [vmem:[%s188] ss:$2 sm:$0xff] %v16
    %v190 = vld.sshfl [vmem:[#allocation1] sm:$0xff pattern:$0x75316420]
    %v191 = vld.sshfl [vmem:[#allocation1 + $0x8] sm:$0xff pattern:$0x75316420]
    %v192 = vld.sshfl [vmem:[#allocation1 + $0x10] sm:$0xff pattern:$0x75316420]
    %v193 = vld.sshfl [vmem:[#allocation1 + $0x18] sm:$0xff pattern:$0x75316420]
    %s198 = scalar_lea.vmem [#allocation1], 1
    %199 = vst [vmem:[%s198] ss:$2 sm:$0xff] %v15
    %s200 = scalar_lea.vmem [#allocation1], 17
    %201 = vst [vmem:[%s200] ss:$2 sm:$0xff] %v16
    %v202 = vld.sshfl [vmem:[#allocation1] sm:$0xff pattern:$0x75316420]
    %v203 = vld.sshfl [vmem:[#allocation1 + $0x8] sm:$0xff pattern:$0x75316420]
    %v204 = vld.sshfl [vmem:[#allocation1 + $0x10] sm:$0xff pattern:$0x75316420]
    %v205 = vld.sshfl [vmem:[#allocation1 + $0x18] sm:$0xff pattern:$0x75316420]
    %210 = vst [vmem:[#allocation1] ss:$2 sm:$0xff] %v15
    %s211 = scalar_lea.vmem [#allocation1], 16
    %212 = vst [vmem:[%s211] ss:$2 sm:$0xff] %v16
    %v213 = vld.sshfl [vmem:[#allocation1] sm:$0xff pattern:$0x75316420]
    %v214 = vld.sshfl [vmem:[#allocation1 + $0x8] sm:$0xff pattern:$0x75316420]
    %v215 = vld.sshfl [vmem:[#allocation1 + $0x10] sm:$0xff pattern:$0x75316420]
    %v216 = vld.sshfl [vmem:[#allocation1 + $0x18] sm:$0xff pattern:$0x75316420]
    %s221 = scalar_lea.vmem [#allocation1], 1
    %222 = vst [vmem:[%s221] ss:$2 sm:$0xff] %v15
    %s223 = scalar_lea.vmem [#allocation1], 17
    %224 = vst [vmem:[%s223] ss:$2 sm:$0xff] %v16
    %v225 = vld.sshfl [vmem:[#allocation1] sm:$0xff pattern:$0x75316420]
    %v226 = vld.sshfl [vmem:[#allocation1 + $0x8] sm:$0xff pattern:$0x75316420]
    %v227 = vld.sshfl [vmem:[#allocation1 + $0x10] sm:$0xff pattern:$0x75316420]
    %v228 = vld.sshfl [vmem:[#allocation1 + $0x18] sm:$0xff pattern:$0x75316420]
    %vm233 = vcmask 1043456
    %v234 = vsel %vm233, %v190, %v202
    %v235 = vsel %vm233, %v191, %v203
    %v236 = vsel %vm233, %v192, %v204
    %v237 = vsel %vm233, %v193, %v205
    %v238 = vsel %vm233, %v213, %v225
    %v239 = vsel %vm233, %v214, %v226
    %v240 = vsel %vm233, %v215, %v227
    %v241 = vsel %vm233, %v216, %v228
    %v242 = vld [vmem:[%s0 + $0x10] sm:$0xff]
    %v243 = vld [vmem:[%s0 + $0x18] sm:$0xff]
    %245 = vset.pattern.permute.xlu0 1
    %246 = vperm.xlu0 %245, %v242
    %v247 = vpop.permute.xlu0 %246
    %250 = vset.pattern.permute.xlu0 1
    %251 = vperm.xlu0 %250, %v243
    %v252 = vpop.permute.xlu0 %251
    %v254 = vadd.f32 %v234, %v247
    %v255 = vadd.f32 %v235, %v247
    %v256 = vadd.f32 %v236, %v247
    %v257 = vadd.f32 %v237, %v247
    %v258 = vadd.f32 %v238, %v252
    %v259 = vadd.f32 %v239, %v252
    %v260 = vadd.f32 %v240, %v252
    %v261 = vadd.f32 %v241, %v252
    %262 = vrot.lane.b32.xlu0 %v183, 17
    %v263 = vpop.permute.xlu0 %262
    %264 = vrot.lane.b32.xlu0 %v184, 17
    %v265 = vpop.permute.xlu0 %264
    %266 = vrot.lane.b32.xlu0 %v185, 17
    %v267 = vpop.permute.xlu0 %266
    %268 = vrot.lane.b32.xlu0 %v186, 17
    %v269 = vpop.permute.xlu0 %268
    %v270 = vlaneseq
    %v271 = vand.u32 %v270, 127
    %vm272 = vcmp.lt.s32.totalorder %v271, 17
    %v273 = vsel %vm272, %v267, %v269
    %v274 = vsel %vm272, %v265, %v267
    %v275 = vsel %vm272, %v263, %v265
    %v276 = vsel %vm272, %v269, %v263
    %v277 = vld [vmem:[%s1] ss:$8 sm:$0xf]
    %v279 = vperm.slane %v277, 0
    %v280 = vperm.slane %v277, 1
    %v281 = vperm.slane %v277, 2
    %v282 = vperm.slane %v277, 3
    %v287 = vmul.f32 %v276, %v279
    %v288 = vmul.f32 %v275, %v280
    %v289 = vmul.f32 %v274, %v281
    %v290 = vmul.f32 %v273, %v282
    %v291 = vld [vmem:[%s0 + $0x20] sm:$0xff]
    %v292 = vld [vmem:[%s0 + $0x28] sm:$0xff]
    %294 = vset.pattern.permute.xlu0 12
    %295 = vperm.xlu0 %294, %v291
    %v296 = vpop.permute.xlu0 %295
    %299 = vset.pattern.permute.xlu0 12
    %300 = vperm.xlu0 %299, %v292
    %v301 = vpop.permute.xlu0 %300
    %v303 = vperm.slane %v287, 4
    %v304 = vperm.slane %v288, 4
    %v305 = vperm.slane %v289, 4
    %v306 = vperm.slane %v290, 4
    %v307 = vmul.f32 %v296, %v303
    %v308 = vmul.f32 %v296, %v304
    %v309 = vmul.f32 %v296, %v305
    %v310 = vmul.f32 %v296, %v306
    %v311 = vmul.f32 %v301, %v303
    %v312 = vmul.f32 %v301, %v304
    %v313 = vmul.f32 %v301, %v305
    %v314 = vmul.f32 %v301, %v306
    %315 = vset.pattern.permute.xlu0 13
    %316 = vperm.xlu0 %315, %v291
    %v317 = vpop.permute.xlu0 %316
    %319 = vset.pattern.permute.xlu0 13
    %320 = vperm.xlu0 %319, %v292
    %v321 = vpop.permute.xlu0 %320
    %v323 = vperm.slane %v287, 5
    %v324 = vperm.slane %v288, 5
    %v325 = vperm.slane %v289, 5
    %v326 = vperm.slane %v290, 5
    %v327 = vmul.f32 %v317, %v323
    %v328 = vmul.f32 %v317, %v324
    %v329 = vmul.f32 %v317, %v325
    %v330 = vmul.f32 %v317, %v326
    %v331 = vmul.f32 %v321, %v323
    %v332 = vmul.f32 %v321, %v324
    %v333 = vmul.f32 %v321, %v325
    %v334 = vmul.f32 %v321, %v326
    %v335 = vadd.f32 %v307, %v327
    %v336 = vadd.f32 %v308, %v328
    %v337 = vadd.f32 %v309, %v329
    %v338 = vadd.f32 %v310, %v330
    %v339 = vadd.f32 %v311, %v331
    %v340 = vadd.f32 %v312, %v332
    %v341 = vadd.f32 %v313, %v333
    %v342 = vadd.f32 %v314, %v334
    %343 = vset.pattern.permute.xlu0 14
    %344 = vperm.xlu0 %343, %v291
    %v345 = vpop.permute.xlu0 %344
    %347 = vset.pattern.permute.xlu0 14
    %348 = vperm.xlu0 %347, %v292
    %v349 = vpop.permute.xlu0 %348
    %v351 = vperm.slane %v287, 6
    %v352 = vperm.slane %v288, 6
    %v353 = vperm.slane %v289, 6
    %v354 = vperm.slane %v290, 6
    %v355 = vmul.f32 %v345, %v351
    %v356 = vmul.f32 %v345, %v352
    %v357 = vmul.f32 %v345, %v353
    %v358 = vmul.f32 %v345, %v354
    %v359 = vmul.f32 %v349, %v351
    %v360 = vmul.f32 %v349, %v352
    %v361 = vmul.f32 %v349, %v353
    %v362 = vmul.f32 %v349, %v354
    %v363 = vadd.f32 %v335, %v355
    %v364 = vadd.f32 %v336, %v356
    %v365 = vadd.f32 %v337, %v357
    %v366 = vadd.f32 %v338, %v358
    %v367 = vadd.f32 %v339, %v359
    %v368 = vadd.f32 %v340, %v360
    %v369 = vadd.f32 %v341, %v361
    %v370 = vadd.f32 %v342, %v362
    %371 = vset.pattern.permute.xlu0 15
    %372 = vperm.xlu0 %371, %v291
    %v373 = vpop.permute.xlu0 %372
    %375 = vset.pattern.permute.xlu0 15
    %376 = vperm.xlu0 %375, %v292
    %v377 = vpop.permute.xlu0 %376
    %v379 = vperm.slane %v287, 7
    %v380 = vperm.slane %v288, 7
    %v381 = vperm.slane %v289, 7
    %v382 = vperm.slane %v290, 7
    %v383 = vmul.f32 %v373, %v379
    %v384 = vmul.f32 %v373, %v380
    %v385 = vmul.f32 %v373, %v381
    %v386 = vmul.f32 %v373, %v382
    %v387 = vmul.f32 %v377, %v379
    %v388 = vmul.f32 %v377, %v380
    %v389 = vmul.f32 %v377, %v381
    %v390 = vmul.f32 %v377, %v382
    %v391 = vadd.f32 %v363, %v383
    %v392 = vadd.f32 %v364, %v384
    %v393 = vadd.f32 %v365, %v385
    %v394 = vadd.f32 %v366, %v386
    %v395 = vadd.f32 %v367, %v387
    %v396 = vadd.f32 %v368, %v388
    %v397 = vadd.f32 %v369, %v389
    %v398 = vadd.f32 %v370, %v390
    %v399 = vadd.f32 %v254, %v391
    %v400 = vadd.f32 %v255, %v392
    %v401 = vadd.f32 %v256, %v393
    %v402 = vadd.f32 %v257, %v394
    %v403 = vadd.f32 %v258, %v395
    %v404 = vadd.f32 %v259, %v396
    %v405 = vadd.f32 %v260, %v397
    %v406 = vadd.f32 %v261, %v398
    %407 = vrot.lane.b32.xlu0 %v183, 16
    %v408 = vpop.permute.xlu0 %407
    %409 = vrot.lane.b32.xlu0 %v184, 16
    %v410 = vpop.permute.xlu0 %409
    %411 = vrot.lane.b32.xlu0 %v185, 16
    %v412 = vpop.permute.xlu0 %411
    %413 = vrot.lane.b32.xlu0 %v186, 16
    %v414 = vpop.permute.xlu0 %413
    %vm415 = vcmp.lt.s32.totalorder %v271, 16
    %v416 = vsel %vm415, %v412, %v414
    %v417 = vsel %vm415, %v410, %v412
    %v418 = vsel %vm415, %v408, %v410
    %v419 = vsel %vm415, %v414, %v408
    %s420 = scalar_lea.vmem %s1, 1
    %v421 = vld [vmem:[%s420] ss:$8 sm:$0xf]
    %v423 = vperm.slane %v421, 0
    %v424 = vperm.slane %v421, 1
    %v425 = vperm.slane %v421, 2
    %v426 = vperm.slane %v421, 3
    %v431 = vmul.f32 %v419, %v423
    %v432 = vmul.f32 %v418, %v424
    %v433 = vmul.f32 %v417, %v425
    %v434 = vmul.f32 %v416, %v426
    %v435 = vld [vmem:[%s0 + $0x30] sm:$0xff]
    %v436 = vld [vmem:[%s0 + $0x38] sm:$0xff]
    %438 = vset.pattern.permute.xlu0 8
    %439 = vperm.xlu0 %438, %v435
    %v440 = vpop.permute.xlu0 %439
    %443 = vset.pattern.permute.xlu0 8
    %444 = vperm.xlu0 %443, %v436
    %v445 = vpop.permute.xlu0 %444
    %v447 = vperm.slane %v431, 0
    %v448 = vperm.slane %v432, 0
    %v449 = vperm.slane %v433, 0
    %v450 = vperm.slane %v434, 0
    %v451 = vmul.f32 %v440, %v447
    %v452 = vmul.f32 %v440, %v448
    %v453 = vmul.f32 %v440, %v449
    %v454 = vmul.f32 %v440, %v450
    %v455 = vmul.f32 %v445, %v447
    %v456 = vmul.f32 %v445, %v448
    %v457 = vmul.f32 %v445, %v449
    %v458 = vmul.f32 %v445, %v450
    %459 = vset.pattern.permute.xlu0 9
    %460 = vperm.xlu0 %459, %v435
    %v461 = vpop.permute.xlu0 %460
    %463 = vset.pattern.permute.xlu0 9
    %464 = vperm.xlu0 %463, %v436
    %v465 = vpop.permute.xlu0 %464
    %v467 = vperm.slane %v431, 1
    %v468 = vperm.slane %v432, 1
    %v469 = vperm.slane %v433, 1
    %v470 = vperm.slane %v434, 1
    %v471 = vmul.f32 %v461, %v467
    %v472 = vmul.f32 %v461, %v468
    %v473 = vmul.f32 %v461, %v469
    %v474 = vmul.f32 %v461, %v470
    %v475 = vmul.f32 %v465, %v467
    %v476 = vmul.f32 %v465, %v468
    %v477 = vmul.f32 %v465, %v469
    %v478 = vmul.f32 %v465, %v470
    %v479 = vadd.f32 %v451, %v471
    %v480 = vadd.f32 %v452, %v472
    %v481 = vadd.f32 %v453, %v473
    %v482 = vadd.f32 %v454, %v474
    %v483 = vadd.f32 %v455, %v475
    %v484 = vadd.f32 %v456, %v476
    %v485 = vadd.f32 %v457, %v477
    %v486 = vadd.f32 %v458, %v478
    %487 = vset.pattern.permute.xlu0 10
    %488 = vperm.xlu0 %487, %v435
    %v489 = vpop.permute.xlu0 %488
    %491 = vset.pattern.permute.xlu0 10
    %492 = vperm.xlu0 %491, %v436
    %v493 = vpop.permute.xlu0 %492
    %v495 = vperm.slane %v431, 2
    %v496 = vperm.slane %v432, 2
    %v497 = vperm.slane %v433, 2
    %v498 = vperm.slane %v434, 2
    %v499 = vmul.f32 %v489, %v495
    %v500 = vmul.f32 %v489, %v496
    %v501 = vmul.f32 %v489, %v497
    %v502 = vmul.f32 %v489, %v498
    %v503 = vmul.f32 %v493, %v495
    %v504 = vmul.f32 %v493, %v496
    %v505 = vmul.f32 %v493, %v497
    %v506 = vmul.f32 %v493, %v498
    %v507 = vadd.f32 %v479, %v499
    %v508 = vadd.f32 %v480, %v500
    %v509 = vadd.f32 %v481, %v501
    %v510 = vadd.f32 %v482, %v502
    %v511 = vadd.f32 %v483, %v503
    %v512 = vadd.f32 %v484, %v504
    %v513 = vadd.f32 %v485, %v505
    %v514 = vadd.f32 %v486, %v506
    %515 = vset.pattern.permute.xlu0 11
    %516 = vperm.xlu0 %515, %v435
    %v517 = vpop.permute.xlu0 %516
    %519 = vset.pattern.permute.xlu0 11
    %520 = vperm.xlu0 %519, %v436
    %v521 = vpop.permute.xlu0 %520
    %v523 = vperm.slane %v431, 3
    %v524 = vperm.slane %v432, 3
    %v525 = vperm.slane %v433, 3
    %v526 = vperm.slane %v434, 3
    %v527 = vmul.f32 %v517, %v523
    %v528 = vmul.f32 %v517, %v524
    %v529 = vmul.f32 %v517, %v525
    %v530 = vmul.f32 %v517, %v526
    %v531 = vmul.f32 %v521, %v523
    %v532 = vmul.f32 %v521, %v524
    %v533 = vmul.f32 %v521, %v525
    %v534 = vmul.f32 %v521, %v526
    %v535 = vadd.f32 %v507, %v527
    %v536 = vadd.f32 %v508, %v528
    %v537 = vadd.f32 %v509, %v529
    %v538 = vadd.f32 %v510, %v530
    %v539 = vadd.f32 %v511, %v531
    %v540 = vadd.f32 %v512, %v532
    %v541 = vadd.f32 %v513, %v533
    %v542 = vadd.f32 %v514, %v534
    %543 = vset.pattern.permute.xlu0 12
    %544 = vperm.xlu0 %543, %v435
    %v545 = vpop.permute.xlu0 %544
    %547 = vset.pattern.permute.xlu0 12
    %548 = vperm.xlu0 %547, %v436
    %v549 = vpop.permute.xlu0 %548
    %v551 = vperm.slane %v431, 4
    %v552 = vperm.slane %v432, 4
    %v553 = vperm.slane %v433, 4
    %v554 = vperm.slane %v434, 4
    %v555 = vmul.f32 %v545, %v551
    %v556 = vmul.f32 %v545, %v552
    %v557 = vmul.f32 %v545, %v553
    %v558 = vmul.f32 %v545, %v554
    %v559 = vmul.f32 %v549, %v551
    %v560 = vmul.f32 %v549, %v552
    %v561 = vmul.f32 %v549, %v553
    %v562 = vmul.f32 %v549, %v554
    %v563 = vadd.f32 %v535, %v555
    %v564 = vadd.f32 %v536, %v556
    %v565 = vadd.f32 %v537, %v557
    %v566 = vadd.f32 %v538, %v558
    %v567 = vadd.f32 %v539, %v559
    %v568 = vadd.f32 %v540, %v560
    %v569 = vadd.f32 %v541, %v561
    %v570 = vadd.f32 %v542, %v562
    %571 = vset.pattern.permute.xlu0 13
    %572 = vperm.xlu0 %571, %v435
    %v573 = vpop.permute.xlu0 %572
    %575 = vset.pattern.permute.xlu0 13
    %576 = vperm.xlu0 %575, %v436
    %v577 = vpop.permute.xlu0 %576
    %v579 = vperm.slane %v431, 5
    %v580 = vperm.slane %v432, 5
    %v581 = vperm.slane %v433, 5
    %v582 = vperm.slane %v434, 5
    %v583 = vmul.f32 %v573, %v579
    %v584 = vmul.f32 %v573, %v580
    %v585 = vmul.f32 %v573, %v581
    %v586 = vmul.f32 %v573, %v582
    %v587 = vmul.f32 %v577, %v579
    %v588 = vmul.f32 %v577, %v580
    %v589 = vmul.f32 %v577, %v581
    %v590 = vmul.f32 %v577, %v582
    %v591 = vadd.f32 %v563, %v583
    %v592 = vadd.f32 %v564, %v584
    %v593 = vadd.f32 %v565, %v585
    %v594 = vadd.f32 %v566, %v586
    %v595 = vadd.f32 %v567, %v587
    %v596 = vadd.f32 %v568, %v588
    %v597 = vadd.f32 %v569, %v589
    %v598 = vadd.f32 %v570, %v590
    %599 = vset.pattern.permute.xlu0 14
    %600 = vperm.xlu0 %599, %v435
    %v601 = vpop.permute.xlu0 %600
    %603 = vset.pattern.permute.xlu0 14
    %604 = vperm.xlu0 %603, %v436
    %v605 = vpop.permute.xlu0 %604
    %v607 = vperm.slane %v431, 6
    %v608 = vperm.slane %v432, 6
    %v609 = vperm.slane %v433, 6
    %v610 = vperm.slane %v434, 6
    %v611 = vmul.f32 %v601, %v607
    %v612 = vmul.f32 %v601, %v608
    %v613 = vmul.f32 %v601, %v609
    %v614 = vmul.f32 %v601, %v610
    %v615 = vmul.f32 %v605, %v607
    %v616 = vmul.f32 %v605, %v608
    %v617 = vmul.f32 %v605, %v609
    %v618 = vmul.f32 %v605, %v610
    %v619 = vadd.f32 %v591, %v611
    %v620 = vadd.f32 %v592, %v612
    %v621 = vadd.f32 %v593, %v613
    %v622 = vadd.f32 %v594, %v614
    %v623 = vadd.f32 %v595, %v615
    %v624 = vadd.f32 %v596, %v616
    %v625 = vadd.f32 %v597, %v617
    %v626 = vadd.f32 %v598, %v618
    %627 = vset.pattern.permute.xlu0 15
    %628 = vperm.xlu0 %627, %v435
    %v629 = vpop.permute.xlu0 %628
    %631 = vset.pattern.permute.xlu0 15
    %632 = vperm.xlu0 %631, %v436
    %v633 = vpop.permute.xlu0 %632
    %v635 = vperm.slane %v431, 7
    %v636 = vperm.slane %v432, 7
    %v637 = vperm.slane %v433, 7
    %v638 = vperm.slane %v434, 7
    %v639 = vmul.f32 %v629, %v635
    %v640 = vmul.f32 %v629, %v636
    %v641 = vmul.f32 %v629, %v637
    %v642 = vmul.f32 %v629, %v638
    %v643 = vmul.f32 %v633, %v635
    %v644 = vmul.f32 %v633, %v636
    %v645 = vmul.f32 %v633, %v637
    %v646 = vmul.f32 %v633, %v638
    %v647 = vadd.f32 %v619, %v639
    %v648 = vadd.f32 %v620, %v640
    %v649 = vadd.f32 %v621, %v641
    %v650 = vadd.f32 %v622, %v642
    %v651 = vadd.f32 %v623, %v643
    %v652 = vadd.f32 %v624, %v644
    %v653 = vadd.f32 %v625, %v645
    %v654 = vadd.f32 %v626, %v646
    %v655 = vadd.f32 %v399, %v647
    %v656 = vadd.f32 %v400, %v648
    %v657 = vadd.f32 %v401, %v649
    %v658 = vadd.f32 %v402, %v650
    %v659 = vadd.f32 %v403, %v651
    %v660 = vadd.f32 %v404, %v652
    %v661 = vadd.f32 %v405, %v653
    %v662 = vadd.f32 %v406, %v654
    %663 = vrot.lane.b32.xlu0 %v183, 15
    %v664 = vpop.permute.xlu0 %663
    %665 = vrot.lane.b32.xlu0 %v184, 15
    %v666 = vpop.permute.xlu0 %665
    %667 = vrot.lane.b32.xlu0 %v185, 15
    %v668 = vpop.permute.xlu0 %667
    %669 = vrot.lane.b32.xlu0 %v186, 15
    %v670 = vpop.permute.xlu0 %669
    %vm671 = vcmp.lt.s32.totalorder %v271, 15
    %v672 = vsel %vm671, %v668, %v670
    %v673 = vsel %vm671, %v666, %v668
    %v674 = vsel %vm671, %v664, %v666
    %v675 = vsel %vm671, %v670, %v664
    %s676 = scalar_lea.vmem %s1, 2
    %v677 = vld [vmem:[%s676] ss:$8 sm:$0xf]
    %v679 = vperm.slane %v677, 0
    %v680 = vperm.slane %v677, 1
    %v681 = vperm.slane %v677, 2
    %v682 = vperm.slane %v677, 3
    %v687 = vmul.f32 %v675, %v679
    %v688 = vmul.f32 %v674, %v680
    %v689 = vmul.f32 %v673, %v681
    %v690 = vmul.f32 %v672, %v682
    %v691 = vld [vmem:[%s0 + $0x40] sm:$0xff]
    %v692 = vld [vmem:[%s0 + $0x48] sm:$0xff]
    %694 = vset.pattern.permute.xlu0 8
    %695 = vperm.xlu0 %694, %v691
    %v696 = vpop.permute.xlu0 %695
    %699 = vset.pattern.permute.xlu0 8
    %700 = vperm.xlu0 %699, %v692
    %v701 = vpop.permute.xlu0 %700
    %v703 = vperm.slane %v687, 0
    %v704 = vperm.slane %v688, 0
    %v705 = vperm.slane %v689, 0
    %v706 = vperm.slane %v690, 0
    %v707 = vmul.f32 %v696, %v703
    %v708 = vmul.f32 %v696, %v704
    %v709 = vmul.f32 %v696, %v705
    %v710 = vmul.f32 %v696, %v706
    %v711 = vmul.f32 %v701, %v703
    %v712 = vmul.f32 %v701, %v704
    %v713 = vmul.f32 %v701, %v705
    %v714 = vmul.f32 %v701, %v706
    %715 = vset.pattern.permute.xlu0 9
    %716 = vperm.xlu0 %715, %v691
    %v717 = vpop.permute.xlu0 %716
    %719 = vset.pattern.permute.xlu0 9
    %720 = vperm.xlu0 %719, %v692
    %v721 = vpop.permute.xlu0 %720
    %v723 = vperm.slane %v687, 1
    %v724 = vperm.slane %v688, 1
    %v725 = vperm.slane %v689, 1
    %v726 = vperm.slane %v690, 1
    %v727 = vmul.f32 %v717, %v723
    %v728 = vmul.f32 %v717, %v724
    %v729 = vmul.f32 %v717, %v725
    %v730 = vmul.f32 %v717, %v726
    %v731 = vmul.f32 %v721, %v723
    %v732 = vmul.f32 %v721, %v724
    %v733 = vmul.f32 %v721, %v725
    %v734 = vmul.f32 %v721, %v726
    %v735 = vadd.f32 %v707, %v727
    %v736 = vadd.f32 %v708, %v728
    %v737 = vadd.f32 %v709, %v729
    %v738 = vadd.f32 %v710, %v730
    %v739 = vadd.f32 %v711, %v731
    %v740 = vadd.f32 %v712, %v732
    %v741 = vadd.f32 %v713, %v733
    %v742 = vadd.f32 %v714, %v734
    %743 = vset.pattern.permute.xlu0 10
    %744 = vperm.xlu0 %743, %v691
    %v745 = vpop.permute.xlu0 %744
    %747 = vset.pattern.permute.xlu0 10
    %748 = vperm.xlu0 %747, %v692
    %v749 = vpop.permute.xlu0 %748
    %v751 = vperm.slane %v687, 2
    %v752 = vperm.slane %v688, 2
    %v753 = vperm.slane %v689, 2
    %v754 = vperm.slane %v690, 2
    %v755 = vmul.f32 %v745, %v751
    %v756 = vmul.f32 %v745, %v752
    %v757 = vmul.f32 %v745, %v753
    %v758 = vmul.f32 %v745, %v754
    %v759 = vmul.f32 %v749, %v751
    %v760 = vmul.f32 %v749, %v752
    %v761 = vmul.f32 %v749, %v753
    %v762 = vmul.f32 %v749, %v754
    %v763 = vadd.f32 %v735, %v755
    %v764 = vadd.f32 %v736, %v756
    %v765 = vadd.f32 %v737, %v757
    %v766 = vadd.f32 %v738, %v758
    %v767 = vadd.f32 %v739, %v759
    %v768 = vadd.f32 %v740, %v760
    %v769 = vadd.f32 %v741, %v761
    %v770 = vadd.f32 %v742, %v762
    %771 = vset.pattern.permute.xlu0 11
    %772 = vperm.xlu0 %771, %v691
    %v773 = vpop.permute.xlu0 %772
    %775 = vset.pattern.permute.xlu0 11
    %776 = vperm.xlu0 %775, %v692
    %v777 = vpop.permute.xlu0 %776
    %v779 = vperm.slane %v687, 3
    %v780 = vperm.slane %v688, 3
    %v781 = vperm.slane %v689, 3
    %v782 = vperm.slane %v690, 3
    %v783 = vmul.f32 %v773, %v779
    %v784 = vmul.f32 %v773, %v780
    %v785 = vmul.f32 %v773, %v781
    %v786 = vmul.f32 %v773, %v782
    %v787 = vmul.f32 %v777, %v779
    %v788 = vmul.f32 %v777, %v780
    %v789 = vmul.f32 %v777, %v781
    %v790 = vmul.f32 %v777, %v782
    %v791 = vadd.f32 %v763, %v783
    %v792 = vadd.f32 %v764, %v784
    %v793 = vadd.f32 %v765, %v785
    %v794 = vadd.f32 %v766, %v786
    %v795 = vadd.f32 %v767, %v787
    %v796 = vadd.f32 %v768, %v788
    %v797 = vadd.f32 %v769, %v789
    %v798 = vadd.f32 %v770, %v790
    %v799 = vadd.f32 %v655, %v791
    %v800 = vadd.f32 %v656, %v792
    %v801 = vadd.f32 %v657, %v793
    %v802 = vadd.f32 %v658, %v794
    %v803 = vadd.f32 %v659, %v795
    %v804 = vadd.f32 %v660, %v796
    %v805 = vadd.f32 %v661, %v797
    %v806 = vadd.f32 %v662, %v798
    %807 = vrot.lane.b32.xlu0 %v179, 1
    %v808 = vpop.permute.xlu0 %807
    %809 = vrot.lane.b32.xlu0 %v183, 1
    %v810 = vpop.permute.xlu0 %809
    %811 = vrot.lane.b32.xlu0 %v180, 1
    %v812 = vpop.permute.xlu0 %811
    %813 = vrot.lane.b32.xlu0 %v184, 1
    %v814 = vpop.permute.xlu0 %813
    %815 = vrot.lane.b32.xlu0 %v181, 1
    %v816 = vpop.permute.xlu0 %815
    %817 = vrot.lane.b32.xlu0 %v185, 1
    %v818 = vpop.permute.xlu0 %817
    %819 = vrot.lane.b32.xlu0 %v182, 1
    %v820 = vpop.permute.xlu0 %819
    %821 = vrot.lane.b32.xlu0 %v186, 1
    %v822 = vpop.permute.xlu0 %821
    %vm823 = vcmp.lt.s32.totalorder %v271, 1
    %v824 = vsel %vm823, %v816, %v820
    %v825 = vsel %vm823, %v818, %v822
    %v826 = vsel %vm823, %v812, %v816
    %v827 = vsel %vm823, %v814, %v818
    %v828 = vsel %vm823, %v808, %v812
    %v829 = vsel %vm823, %v810, %v814
    %v830 = vsel %vm823, %v820, %v808
    %v831 = vsel %vm823, %v822, %v810
    %s832 = scalar_lea.vmem %s1, 3
    %v833 = vld [vmem:[%s832] ss:$8 sm:$0xf]
    %v835 = vperm.slane %v833, 0
    %v836 = vperm.slane %v833, 1
    %v837 = vperm.slane %v833, 2
    %v838 = vperm.slane %v833, 3
    %v843 = vmul.f32 %v830, %v835
    %v844 = vmul.f32 %v828, %v836
    %v845 = vmul.f32 %v826, %v837
    %v846 = vmul.f32 %v824, %v838
    %v847 = vmul.f32 %v831, %v835
    %v848 = vmul.f32 %v829, %v836
    %v849 = vmul.f32 %v827, %v837
    %v850 = vmul.f32 %v825, %v838
    %v851 = vld [vmem:[%s0 + $0x50] sm:$0xff]
    %v852 = vld [vmem:[%s0 + $0x58] sm:$0xff]
    %854 = vset.pattern.permute.xlu0 4
    %855 = vperm.xlu0 %854, %v851
    %v856 = vpop.permute.xlu0 %855
    %859 = vset.pattern.permute.xlu0 4
    %860 = vperm.xlu0 %859, %v852
    %v861 = vpop.permute.xlu0 %860
    %v863 = vperm.slane %v843, 4
    %v864 = vperm.slane %v844, 4
    %v865 = vperm.slane %v845, 4
    %v866 = vperm.slane %v846, 4
    %v867 = vmul.f32 %v856, %v863
    %v868 = vmul.f32 %v856, %v864
    %v869 = vmul.f32 %v856, %v865
    %v870 = vmul.f32 %v856, %v866
    %v871 = vmul.f32 %v861, %v863
    %v872 = vmul.f32 %v861, %v864
    %v873 = vmul.f32 %v861, %v865
    %v874 = vmul.f32 %v861, %v866
    %875 = vset.pattern.permute.xlu0 5
    %876 = vperm.xlu0 %875, %v851
    %v877 = vpop.permute.xlu0 %876
    %879 = vset.pattern.permute.xlu0 5
    %880 = vperm.xlu0 %879, %v852
    %v881 = vpop.permute.xlu0 %880
    %v883 = vperm.slane %v843, 5
    %v884 = vperm.slane %v844, 5
    %v885 = vperm.slane %v845, 5
    %v886 = vperm.slane %v846, 5
    %v887 = vmul.f32 %v877, %v883
    %v888 = vmul.f32 %v877, %v884
    %v889 = vmul.f32 %v877, %v885
    %v890 = vmul.f32 %v877, %v886
    %v891 = vmul.f32 %v881, %v883
    %v892 = vmul.f32 %v881, %v884
    %v893 = vmul.f32 %v881, %v885
    %v894 = vmul.f32 %v881, %v886
    %v895 = vadd.f32 %v867, %v887
    %v896 = vadd.f32 %v868, %v888
    %v897 = vadd.f32 %v869, %v889
    %v898 = vadd.f32 %v870, %v890
    %v899 = vadd.f32 %v871, %v891
    %v900 = vadd.f32 %v872, %v892
    %v901 = vadd.f32 %v873, %v893
    %v902 = vadd.f32 %v874, %v894
    %903 = vset.pattern.permute.xlu0 6
    %904 = vperm.xlu0 %903, %v851
    %v905 = vpop.permute.xlu0 %904
    %907 = vset.pattern.permute.xlu0 6
    %908 = vperm.xlu0 %907, %v852
    %v909 = vpop.permute.xlu0 %908
    %v911 = vperm.slane %v843, 6
    %v912 = vperm.slane %v844, 6
    %v913 = vperm.slane %v845, 6
    %v914 = vperm.slane %v846, 6
    %v915 = vmul.f32 %v905, %v911
    %v916 = vmul.f32 %v905, %v912
    %v917 = vmul.f32 %v905, %v913
    %v918 = vmul.f32 %v905, %v914
    %v919 = vmul.f32 %v909, %v911
    %v920 = vmul.f32 %v909, %v912
    %v921 = vmul.f32 %v909, %v913
    %v922 = vmul.f32 %v909, %v914
    %v923 = vadd.f32 %v895, %v915
    %v924 = vadd.f32 %v896, %v916
    %v925 = vadd.f32 %v897, %v917
    %v926 = vadd.f32 %v898, %v918
    %v927 = vadd.f32 %v899, %v919
    %v928 = vadd.f32 %v900, %v920
    %v929 = vadd.f32 %v901, %v921
    %v930 = vadd.f32 %v902, %v922
    %931 = vset.pattern.permute.xlu0 7
    %932 = vperm.xlu0 %931, %v851
    %v933 = vpop.permute.xlu0 %932
    %935 = vset.pattern.permute.xlu0 7
    %936 = vperm.xlu0 %935, %v852
    %v937 = vpop.permute.xlu0 %936
    %v939 = vperm.slane %v843, 7
    %v940 = vperm.slane %v844, 7
    %v941 = vperm.slane %v845, 7
    %v942 = vperm.slane %v846, 7
    %v943 = vmul.f32 %v933, %v939
    %v944 = vmul.f32 %v933, %v940
    %v945 = vmul.f32 %v933, %v941
    %v946 = vmul.f32 %v933, %v942
    %v947 = vmul.f32 %v937, %v939
    %v948 = vmul.f32 %v937, %v940
    %v949 = vmul.f32 %v937, %v941
    %v950 = vmul.f32 %v937, %v942
    %v951 = vadd.f32 %v923, %v943
    %v952 = vadd.f32 %v924, %v944
    %v953 = vadd.f32 %v925, %v945
    %v954 = vadd.f32 %v926, %v946
    %v955 = vadd.f32 %v927, %v947
    %v956 = vadd.f32 %v928, %v948
    %v957 = vadd.f32 %v929, %v949
    %v958 = vadd.f32 %v930, %v950
    %959 = vset.pattern.permute.xlu0 12
    %960 = vperm.xlu0 %959, %v851
    %v961 = vpop.permute.xlu0 %960
    %963 = vset.pattern.permute.xlu0 12
    %964 = vperm.xlu0 %963, %v852
    %v965 = vpop.permute.xlu0 %964
    %v967 = vperm.slane %v847, 4
    %v968 = vperm.slane %v848, 4
    %v969 = vperm.slane %v849, 4
    %v970 = vperm.slane %v850, 4
    %v971 = vmul.f32 %v961, %v967
    %v972 = vmul.f32 %v961, %v968
    %v973 = vmul.f32 %v961, %v969
    %v974 = vmul.f32 %v961, %v970
    %v975 = vmul.f32 %v965, %v967
    %v976 = vmul.f32 %v965, %v968
    %v977 = vmul.f32 %v965, %v969
    %v978 = vmul.f32 %v965, %v970
    %v979 = vadd.f32 %v951, %v971
    %v980 = vadd.f32 %v952, %v972
    %v981 = vadd.f32 %v953, %v973
    %v982 = vadd.f32 %v954, %v974
    %v983 = vadd.f32 %v955, %v975
    %v984 = vadd.f32 %v956, %v976
    %v985 = vadd.f32 %v957, %v977
    %v986 = vadd.f32 %v958, %v978
    %987 = vset.pattern.permute.xlu0 13
    %988 = vperm.xlu0 %987, %v851
    %v989 = vpop.permute.xlu0 %988
    %991 = vset.pattern.permute.xlu0 13
    %992 = vperm.xlu0 %991, %v852
    %v993 = vpop.permute.xlu0 %992
    %v995 = vperm.slane %v847, 5
    %v996 = vperm.slane %v848, 5
    %v997 = vperm.slane %v849, 5
    %v998 = vperm.slane %v850, 5
    %v999 = vmul.f32 %v989, %v995
    %v1000 = vmul.f32 %v989, %v996
    %v1001 = vmul.f32 %v989, %v997
    %v1002 = vmul.f32 %v989, %v998
    %v1003 = vmul.f32 %v993, %v995
    %v1004 = vmul.f32 %v993, %v996
    %v1005 = vmul.f32 %v993, %v997
    %v1006 = vmul.f32 %v993, %v998
    %v1007 = vadd.f32 %v979, %v999
    %v1008 = vadd.f32 %v980, %v1000
    %v1009 = vadd.f32 %v981, %v1001
    %v1010 = vadd.f32 %v982, %v1002
    %v1011 = vadd.f32 %v983, %v1003
    %v1012 = vadd.f32 %v984, %v1004
    %v1013 = vadd.f32 %v985, %v1005
    %v1014 = vadd.f32 %v986, %v1006
    %1015 = vset.pattern.permute.xlu0 14
    %1016 = vperm.xlu0 %1015, %v851
    %v1017 = vpop.permute.xlu0 %1016
    %1019 = vset.pattern.permute.xlu0 14
    %1020 = vperm.xlu0 %1019, %v852
    %v1021 = vpop.permute.xlu0 %1020
    %v1023 = vperm.slane %v847, 6
    %v1024 = vperm.slane %v848, 6
    %v1025 = vperm.slane %v849, 6
    %v1026 = vperm.slane %v850, 6
    %v1027 = vmul.f32 %v1017, %v1023
    %v1028 = vmul.f32 %v1017, %v1024
    %v1029 = vmul.f32 %v1017, %v1025
    %v1030 = vmul.f32 %v1017, %v1026
    %v1031 = vmul.f32 %v1021, %v1023
    %v1032 = vmul.f32 %v1021, %v1024
    %v1033 = vmul.f32 %v1021, %v1025
    %v1034 = vmul.f32 %v1021, %v1026
    %v1035 = vadd.f32 %v1007, %v1027
    %v1036 = vadd.f32 %v1008, %v1028
    %v1037 = vadd.f32 %v1009, %v1029
    %v1038 = vadd.f32 %v1010, %v1030
    %v1039 = vadd.f32 %v1011, %v1031
    %v1040 = vadd.f32 %v1012, %v1032
    %v1041 = vadd.f32 %v1013, %v1033
    %v1042 = vadd.f32 %v1014, %v1034
    %1043 = vset.pattern.permute.xlu0 15
    %1044 = vperm.xlu0 %1043, %v851
    %v1045 = vpop.permute.xlu0 %1044
    %1047 = vset.pattern.permute.xlu0 15
    %1048 = vperm.xlu0 %1047, %v852
    %v1049 = vpop.permute.xlu0 %1048
    %v1051 = vperm.slane %v847, 7
    %v1052 = vperm.slane %v848, 7
    %v1053 = vperm.slane %v849, 7
    %v1054 = vperm.slane %v850, 7
    %v1055 = vmul.f32 %v1045, %v1051
    %v1056 = vmul.f32 %v1045, %v1052
    %v1057 = vmul.f32 %v1045, %v1053
    %v1058 = vmul.f32 %v1045, %v1054
    %v1059 = vmul.f32 %v1049, %v1051
    %v1060 = vmul.f32 %v1049, %v1052
    %v1061 = vmul.f32 %v1049, %v1053
    %v1062 = vmul.f32 %v1049, %v1054
    %v1063 = vadd.f32 %v1035, %v1055
    %v1064 = vadd.f32 %v1036, %v1056
    %v1065 = vadd.f32 %v1037, %v1057
    %v1066 = vadd.f32 %v1038, %v1058
    %v1067 = vadd.f32 %v1039, %v1059
    %v1068 = vadd.f32 %v1040, %v1060
    %v1069 = vadd.f32 %v1041, %v1061
    %v1070 = vadd.f32 %v1042, %v1062
    %v1071 = vadd.f32 %v799, %v1063
    %v1072 = vadd.f32 %v800, %v1064
    %v1073 = vadd.f32 %v801, %v1065
    %v1074 = vadd.f32 %v802, %v1066
    %v1075 = vadd.f32 %v803, %v1067
    %v1076 = vadd.f32 %v804, %v1068
    %v1077 = vadd.f32 %v805, %v1069
    %v1078 = vadd.f32 %v806, %v1070
    %v1079 = vld [vmem:[%s0 + $0x60] sm:$0xff]
    %v1080 = vld [vmem:[%s0 + $0x68] sm:$0xff]
    %1082 = vset.pattern.permute.xlu0 0
    %1083 = vperm.xlu0 %1082, %v1079
    %v1084 = vpop.permute.xlu0 %1083
    %1087 = vset.pattern.permute.xlu0 0
    %1088 = vperm.xlu0 %1087, %v1080
    %v1089 = vpop.permute.xlu0 %1088
    %v1091 = vperm.slane %v179, 0
    %v1092 = vperm.slane %v180, 0
    %v1093 = vperm.slane %v181, 0
    %v1094 = vperm.slane %v182, 0
    %v1095 = vmul.f32 %v1084, %v1091
    %v1096 = vmul.f32 %v1084, %v1092
    %v1097 = vmul.f32 %v1084, %v1093
    %v1098 = vmul.f32 %v1084, %v1094
    %v1099 = vmul.f32 %v1089, %v1091
    %v1100 = vmul.f32 %v1089, %v1092
    %v1101 = vmul.f32 %v1089, %v1093
    %v1102 = vmul.f32 %v1089, %v1094
    %1103 = vset.pattern.permute.xlu0 1
    %1104 = vperm.xlu0 %1103, %v1079
    %v1105 = vpop.permute.xlu0 %1104
    %1107 = vset.pattern.permute.xlu0 1
    %1108 = vperm.xlu0 %1107, %v1080
    %v1109 = vpop.permute.xlu0 %1108
    %v1111 = vperm.slane %v179, 1
    %v1112 = vperm.slane %v180, 1
    %v1113 = vperm.slane %v181, 1
    %v1114 = vperm.slane %v182, 1
    %v1115 = vmul.f32 %v1105, %v1111
    %v1116 = vmul.f32 %v1105, %v1112
    %v1117 = vmul.f32 %v1105, %v1113
    %v1118 = vmul.f32 %v1105, %v1114
    %v1119 = vmul.f32 %v1109, %v1111
    %v1120 = vmul.f32 %v1109, %v1112
    %v1121 = vmul.f32 %v1109, %v1113
    %v1122 = vmul.f32 %v1109, %v1114
    %v1123 = vadd.f32 %v1095, %v1115
    %v1124 = vadd.f32 %v1096, %v1116
    %v1125 = vadd.f32 %v1097, %v1117
    %v1126 = vadd.f32 %v1098, %v1118
    %v1127 = vadd.f32 %v1099, %v1119
    %v1128 = vadd.f32 %v1100, %v1120
    %v1129 = vadd.f32 %v1101, %v1121
    %v1130 = vadd.f32 %v1102, %v1122
    %1131 = vset.pattern.permute.xlu0 2
    %1132 = vperm.xlu0 %1131, %v1079
    %v1133 = vpop.permute.xlu0 %1132
    %1135 = vset.pattern.permute.xlu0 2
    %1136 = vperm.xlu0 %1135, %v1080
    %v1137 = vpop.permute.xlu0 %1136
    %v1139 = vperm.slane %v179, 2
    %v1140 = vperm.slane %v180, 2
    %v1141 = vperm.slane %v181, 2
    %v1142 = vperm.slane %v182, 2
    %v1143 = vmul.f32 %v1133, %v1139
    %v1144 = vmul.f32 %v1133, %v1140
    %v1145 = vmul.f32 %v1133, %v1141
    %v1146 = vmul.f32 %v1133, %v1142
    %v1147 = vmul.f32 %v1137, %v1139
    %v1148 = vmul.f32 %v1137, %v1140
    %v1149 = vmul.f32 %v1137, %v1141
    %v1150 = vmul.f32 %v1137, %v1142
    %v1151 = vadd.f32 %v1123, %v1143
    %v1152 = vadd.f32 %v1124, %v1144
    %v1153 = vadd.f32 %v1125, %v1145
    %v1154 = vadd.f32 %v1126, %v1146
    %v1155 = vadd.f32 %v1127, %v1147
    %v1156 = vadd.f32 %v1128, %v1148
    %v1157 = vadd.f32 %v1129, %v1149
    %v1158 = vadd.f32 %v1130, %v1150
    %1159 = vset.pattern.permute.xlu0 3
    %1160 = vperm.xlu0 %1159, %v1079
    %v1161 = vpop.permute.xlu0 %1160
    %1163 = vset.pattern.permute.xlu0 3
    %1164 = vperm.xlu0 %1163, %v1080
    %v1165 = vpop.permute.xlu0 %1164
    %v1167 = vperm.slane %v179, 3
    %v1168 = vperm.slane %v180, 3
    %v1169 = vperm.slane %v181, 3
    %v1170 = vperm.slane %v182, 3
    %v1171 = vmul.f32 %v1161, %v1167
    %v1172 = vmul.f32 %v1161, %v1168
    %v1173 = vmul.f32 %v1161, %v1169
    %v1174 = vmul.f32 %v1161, %v1170
    %v1175 = vmul.f32 %v1165, %v1167
    %v1176 = vmul.f32 %v1165, %v1168
    %v1177 = vmul.f32 %v1165, %v1169
    %v1178 = vmul.f32 %v1165, %v1170
    %v1179 = vadd.f32 %v1151, %v1171
    %v1180 = vadd.f32 %v1152, %v1172
    %v1181 = vadd.f32 %v1153, %v1173
    %v1182 = vadd.f32 %v1154, %v1174
    %v1183 = vadd.f32 %v1155, %v1175
    %v1184 = vadd.f32 %v1156, %v1176
    %v1185 = vadd.f32 %v1157, %v1177
    %v1186 = vadd.f32 %v1158, %v1178
    %1187 = vset.pattern.permute.xlu0 4
    %1188 = vperm.xlu0 %1187, %v1079
    %v1189 = vpop.permute.xlu0 %1188
    %1191 = vset.pattern.permute.xlu0 4
    %1192 = vperm.xlu0 %1191, %v1080
    %v1193 = vpop.permute.xlu0 %1192
    %v1195 = vperm.slane %v179, 4
    %v1196 = vperm.slane %v180, 4
    %v1197 = vperm.slane %v181, 4
    %v1198 = vperm.slane %v182, 4
    %v1199 = vmul.f32 %v1189, %v1195
    %v1200 = vmul.f32 %v1189, %v1196
    %v1201 = vmul.f32 %v1189, %v1197
    %v1202 = vmul.f32 %v1189, %v1198
    %v1203 = vmul.f32 %v1193, %v1195
    %v1204 = vmul.f32 %v1193, %v1196
    %v1205 = vmul.f32 %v1193, %v1197
    %v1206 = vmul.f32 %v1193, %v1198
    %v1207 = vadd.f32 %v1179, %v1199
    %v1208 = vadd.f32 %v1180, %v1200
    %v1209 = vadd.f32 %v1181, %v1201
    %v1210 = vadd.f32 %v1182, %v1202
    %v1211 = vadd.f32 %v1183, %v1203
    %v1212 = vadd.f32 %v1184, %v1204
    %v1213 = vadd.f32 %v1185, %v1205
    %v1214 = vadd.f32 %v1186, %v1206
    %1215 = vset.pattern.permute.xlu0 5
    %1216 = vperm.xlu0 %1215, %v1079
    %v1217 = vpop.permute.xlu0 %1216
    %1219 = vset.pattern.permute.xlu0 5
    %1220 = vperm.xlu0 %1219, %v1080
    %v1221 = vpop.permute.xlu0 %1220
    %v1223 = vperm.slane %v179, 5
    %v1224 = vperm.slane %v180, 5
    %v1225 = vperm.slane %v181, 5
    %v1226 = vperm.slane %v182, 5
    %v1227 = vmul.f32 %v1217, %v1223
    %v1228 = vmul.f32 %v1217, %v1224
    %v1229 = vmul.f32 %v1217, %v1225
    %v1230 = vmul.f32 %v1217, %v1226
    %v1231 = vmul.f32 %v1221, %v1223
    %v1232 = vmul.f32 %v1221, %v1224
    %v1233 = vmul.f32 %v1221, %v1225
    %v1234 = vmul.f32 %v1221, %v1226
    %v1235 = vadd.f32 %v1207, %v1227
    %v1236 = vadd.f32 %v1208, %v1228
    %v1237 = vadd.f32 %v1209, %v1229
    %v1238 = vadd.f32 %v1210, %v1230
    %v1239 = vadd.f32 %v1211, %v1231
    %v1240 = vadd.f32 %v1212, %v1232
    %v1241 = vadd.f32 %v1213, %v1233
    %v1242 = vadd.f32 %v1214, %v1234
    %1243 = vset.pattern.permute.xlu0 6
    %1244 = vperm.xlu0 %1243, %v1079
    %v1245 = vpop.permute.xlu0 %1244
    %1247 = vset.pattern.permute.xlu0 6
    %1248 = vperm.xlu0 %1247, %v1080
    %v1249 = vpop.permute.xlu0 %1248
    %v1251 = vperm.slane %v179, 6
    %v1252 = vperm.slane %v180, 6
    %v1253 = vperm.slane %v181, 6
    %v1254 = vperm.slane %v182, 6
    %v1255 = vmul.f32 %v1245, %v1251
    %v1256 = vmul.f32 %v1245, %v1252
    %v1257 = vmul.f32 %v1245, %v1253
    %v1258 = vmul.f32 %v1245, %v1254
    %v1259 = vmul.f32 %v1249, %v1251
    %v1260 = vmul.f32 %v1249, %v1252
    %v1261 = vmul.f32 %v1249, %v1253
    %v1262 = vmul.f32 %v1249, %v1254
    %v1263 = vadd.f32 %v1235, %v1255
    %v1264 = vadd.f32 %v1236, %v1256
    %v1265 = vadd.f32 %v1237, %v1257
    %v1266 = vadd.f32 %v1238, %v1258
    %v1267 = vadd.f32 %v1239, %v1259
    %v1268 = vadd.f32 %v1240, %v1260
    %v1269 = vadd.f32 %v1241, %v1261
    %v1270 = vadd.f32 %v1242, %v1262
    %1271 = vset.pattern.permute.xlu0 7
    %1272 = vperm.xlu0 %1271, %v1079
    %v1273 = vpop.permute.xlu0 %1272
    %1275 = vset.pattern.permute.xlu0 7
    %1276 = vperm.xlu0 %1275, %v1080
    %v1277 = vpop.permute.xlu0 %1276
    %v1279 = vperm.slane %v179, 7
    %v1280 = vperm.slane %v180, 7
    %v1281 = vperm.slane %v181, 7
    %v1282 = vperm.slane %v182, 7
    %v1283 = vmul.f32 %v1273, %v1279
    %v1284 = vmul.f32 %v1273, %v1280
    %v1285 = vmul.f32 %v1273, %v1281
    %v1286 = vmul.f32 %v1273, %v1282
    %v1287 = vmul.f32 %v1277, %v1279
    %v1288 = vmul.f32 %v1277, %v1280
    %v1289 = vmul.f32 %v1277, %v1281
    %v1290 = vmul.f32 %v1277, %v1282
    %v1291 = vadd.f32 %v1263, %v1283
    %v1292 = vadd.f32 %v1264, %v1284
    %v1293 = vadd.f32 %v1265, %v1285
    %v1294 = vadd.f32 %v1266, %v1286
    %v1295 = vadd.f32 %v1267, %v1287
    %v1296 = vadd.f32 %v1268, %v1288
    %v1297 = vadd.f32 %v1269, %v1289
    %v1298 = vadd.f32 %v1270, %v1290
    %1299 = vset.pattern.permute.xlu0 8
    %1300 = vperm.xlu0 %1299, %v1079
    %v1301 = vpop.permute.xlu0 %1300
    %1303 = vset.pattern.permute.xlu0 8
    %1304 = vperm.xlu0 %1303, %v1080
    %v1305 = vpop.permute.xlu0 %1304
    %v1307 = vperm.slane %v183, 0
    %v1308 = vperm.slane %v184, 0
    %v1309 = vperm.slane %v185, 0
    %v1310 = vperm.slane %v186, 0
    %v1311 = vmul.f32 %v1301, %v1307
    %v1312 = vmul.f32 %v1301, %v1308
    %v1313 = vmul.f32 %v1301, %v1309
    %v1314 = vmul.f32 %v1301, %v1310
    %v1315 = vmul.f32 %v1305, %v1307
    %v1316 = vmul.f32 %v1305, %v1308
    %v1317 = vmul.f32 %v1305, %v1309
    %v1318 = vmul.f32 %v1305, %v1310
    %v1319 = vadd.f32 %v1291, %v1311
    %v1320 = vadd.f32 %v1292, %v1312
    %v1321 = vadd.f32 %v1293, %v1313
    %v1322 = vadd.f32 %v1294, %v1314
    %v1323 = vadd.f32 %v1295, %v1315
    %v1324 = vadd.f32 %v1296, %v1316
    %v1325 = vadd.f32 %v1297, %v1317
    %v1326 = vadd.f32 %v1298, %v1318
    %1327 = vset.pattern.permute.xlu0 9
    %1328 = vperm.xlu0 %1327, %v1079
    %v1329 = vpop.permute.xlu0 %1328
    %1331 = vset.pattern.permute.xlu0 9
    %1332 = vperm.xlu0 %1331, %v1080
    %v1333 = vpop.permute.xlu0 %1332
    %v1335 = vperm.slane %v183, 1
    %v1336 = vperm.slane %v184, 1
    %v1337 = vperm.slane %v185, 1
    %v1338 = vperm.slane %v186, 1
    %v1339 = vmul.f32 %v1329, %v1335
    %v1340 = vmul.f32 %v1329, %v1336
    %v1341 = vmul.f32 %v1329, %v1337
    %v1342 = vmul.f32 %v1329, %v1338
    %v1343 = vmul.f32 %v1333, %v1335
    %v1344 = vmul.f32 %v1333, %v1336
    %v1345 = vmul.f32 %v1333, %v1337
    %v1346 = vmul.f32 %v1333, %v1338
    %v1347 = vadd.f32 %v1319, %v1339
    %v1348 = vadd.f32 %v1320, %v1340
    %v1349 = vadd.f32 %v1321, %v1341
    %v1350 = vadd.f32 %v1322, %v1342
    %v1351 = vadd.f32 %v1323, %v1343
    %v1352 = vadd.f32 %v1324, %v1344
    %v1353 = vadd.f32 %v1325, %v1345
    %v1354 = vadd.f32 %v1326, %v1346
    %1355 = vset.pattern.permute.xlu0 10
    %1356 = vperm.xlu0 %1355, %v1079
    %v1357 = vpop.permute.xlu0 %1356
    %1359 = vset.pattern.permute.xlu0 10
    %1360 = vperm.xlu0 %1359, %v1080
    %v1361 = vpop.permute.xlu0 %1360
    %v1363 = vperm.slane %v183, 2
    %v1364 = vperm.slane %v184, 2
    %v1365 = vperm.slane %v185, 2
    %v1366 = vperm.slane %v186, 2
    %v1367 = vmul.f32 %v1357, %v1363
    %v1368 = vmul.f32 %v1357, %v1364
    %v1369 = vmul.f32 %v1357, %v1365
    %v1370 = vmul.f32 %v1357, %v1366
    %v1371 = vmul.f32 %v1361, %v1363
    %v1372 = vmul.f32 %v1361, %v1364
    %v1373 = vmul.f32 %v1361, %v1365
    %v1374 = vmul.f32 %v1361, %v1366
    %v1375 = vadd.f32 %v1347, %v1367
    %v1376 = vadd.f32 %v1348, %v1368
    %v1377 = vadd.f32 %v1349, %v1369
    %v1378 = vadd.f32 %v1350, %v1370
    %v1379 = vadd.f32 %v1351, %v1371
    %v1380 = vadd.f32 %v1352, %v1372
    %v1381 = vadd.f32 %v1353, %v1373
    %v1382 = vadd.f32 %v1354, %v1374
    %1383 = vset.pattern.permute.xlu0 11
    %1384 = vperm.xlu0 %1383, %v1079
    %v1385 = vpop.permute.xlu0 %1384
    %1387 = vset.pattern.permute.xlu0 11
    %1388 = vperm.xlu0 %1387, %v1080
    %v1389 = vpop.permute.xlu0 %1388
    %v1391 = vperm.slane %v183, 3
    %v1392 = vperm.slane %v184, 3
    %v1393 = vperm.slane %v185, 3
    %v1394 = vperm.slane %v186, 3
    %v1395 = vmul.f32 %v1385, %v1391
    %v1396 = vmul.f32 %v1385, %v1392
    %v1397 = vmul.f32 %v1385, %v1393
    %v1398 = vmul.f32 %v1385, %v1394
    %v1399 = vmul.f32 %v1389, %v1391
    %v1400 = vmul.f32 %v1389, %v1392
    %v1401 = vmul.f32 %v1389, %v1393
    %v1402 = vmul.f32 %v1389, %v1394
    %v1403 = vadd.f32 %v1375, %v1395
    %v1404 = vadd.f32 %v1376, %v1396
    %v1405 = vadd.f32 %v1377, %v1397
    %v1406 = vadd.f32 %v1378, %v1398
    %v1407 = vadd.f32 %v1379, %v1399
    %v1408 = vadd.f32 %v1380, %v1400
    %v1409 = vadd.f32 %v1381, %v1401
    %v1410 = vadd.f32 %v1382, %v1402
    %1411 = vset.pattern.permute.xlu0 12
    %1412 = vperm.xlu0 %1411, %v1079
    %v1413 = vpop.permute.xlu0 %1412
    %1415 = vset.pattern.permute.xlu0 12
    %1416 = vperm.xlu0 %1415, %v1080
    %v1417 = vpop.permute.xlu0 %1416
    %v1419 = vperm.slane %v183, 4
    %v1420 = vperm.slane %v184, 4
    %v1421 = vperm.slane %v185, 4
    %v1422 = vperm.slane %v186, 4
    %v1423 = vmul.f32 %v1413, %v1419
    %v1424 = vmul.f32 %v1413, %v1420
    %v1425 = vmul.f32 %v1413, %v1421
    %v1426 = vmul.f32 %v1413, %v1422
    %v1427 = vmul.f32 %v1417, %v1419
    %v1428 = vmul.f32 %v1417, %v1420
    %v1429 = vmul.f32 %v1417, %v1421
    %v1430 = vmul.f32 %v1417, %v1422
    %v1431 = vadd.f32 %v1403, %v1423
    %v1432 = vadd.f32 %v1404, %v1424
    %v1433 = vadd.f32 %v1405, %v1425
    %v1434 = vadd.f32 %v1406, %v1426
    %v1435 = vadd.f32 %v1407, %v1427
    %v1436 = vadd.f32 %v1408, %v1428
    %v1437 = vadd.f32 %v1409, %v1429
    %v1438 = vadd.f32 %v1410, %v1430
    %1439 = vset.pattern.permute.xlu0 13
    %1440 = vperm.xlu0 %1439, %v1079
    %v1441 = vpop.permute.xlu0 %1440
    %1443 = vset.pattern.permute.xlu0 13
    %1444 = vperm.xlu0 %1443, %v1080
    %v1445 = vpop.permute.xlu0 %1444
    %v1447 = vperm.slane %v183, 5
    %v1448 = vperm.slane %v184, 5
    %v1449 = vperm.slane %v185, 5
    %v1450 = vperm.slane %v186, 5
    %v1451 = vmul.f32 %v1441, %v1447
    %v1452 = vmul.f32 %v1441, %v1448
    %v1453 = vmul.f32 %v1441, %v1449
    %v1454 = vmul.f32 %v1441, %v1450
    %v1455 = vmul.f32 %v1445, %v1447
    %v1456 = vmul.f32 %v1445, %v1448
    %v1457 = vmul.f32 %v1445, %v1449
    %v1458 = vmul.f32 %v1445, %v1450
    %v1459 = vadd.f32 %v1431, %v1451
    %v1460 = vadd.f32 %v1432, %v1452
    %v1461 = vadd.f32 %v1433, %v1453
    %v1462 = vadd.f32 %v1434, %v1454
    %v1463 = vadd.f32 %v1435, %v1455
    %v1464 = vadd.f32 %v1436, %v1456
    %v1465 = vadd.f32 %v1437, %v1457
    %v1466 = vadd.f32 %v1438, %v1458
    %1467 = vset.pattern.permute.xlu0 14
    %1468 = vperm.xlu0 %1467, %v1079
    %v1469 = vpop.permute.xlu0 %1468
    %1471 = vset.pattern.permute.xlu0 14
    %1472 = vperm.xlu0 %1471, %v1080
    %v1473 = vpop.permute.xlu0 %1472
    %v1475 = vperm.slane %v183, 6
    %v1476 = vperm.slane %v184, 6
    %v1477 = vperm.slane %v185, 6
    %v1478 = vperm.slane %v186, 6
    %v1479 = vmul.f32 %v1469, %v1475
    %v1480 = vmul.f32 %v1469, %v1476
    %v1481 = vmul.f32 %v1469, %v1477
    %v1482 = vmul.f32 %v1469, %v1478
    %v1483 = vmul.f32 %v1473, %v1475
    %v1484 = vmul.f32 %v1473, %v1476
    %v1485 = vmul.f32 %v1473, %v1477
    %v1486 = vmul.f32 %v1473, %v1478
    %v1487 = vadd.f32 %v1459, %v1479
    %v1488 = vadd.f32 %v1460, %v1480
    %v1489 = vadd.f32 %v1461, %v1481
    %v1490 = vadd.f32 %v1462, %v1482
    %v1491 = vadd.f32 %v1463, %v1483
    %v1492 = vadd.f32 %v1464, %v1484
    %v1493 = vadd.f32 %v1465, %v1485
    %v1494 = vadd.f32 %v1466, %v1486
    %1495 = vset.pattern.permute.xlu0 15
    %1496 = vperm.xlu0 %1495, %v1079
    %v1497 = vpop.permute.xlu0 %1496
    %1499 = vset.pattern.permute.xlu0 15
    %1500 = vperm.xlu0 %1499, %v1080
    %v1501 = vpop.permute.xlu0 %1500
    %v1503 = vperm.slane %v183, 7
    %v1504 = vperm.slane %v184, 7
    %v1505 = vperm.slane %v185, 7
    %v1506 = vperm.slane %v186, 7
    %v1507 = vmul.f32 %v1497, %v1503
    %v1508 = vmul.f32 %v1497, %v1504
    %v1509 = vmul.f32 %v1497, %v1505
    %v1510 = vmul.f32 %v1497, %v1506
    %v1511 = vmul.f32 %v1501, %v1503
    %v1512 = vmul.f32 %v1501, %v1504
    %v1513 = vmul.f32 %v1501, %v1505
    %v1514 = vmul.f32 %v1501, %v1506
    %v1515 = vadd.f32 %v1487, %v1507
    %v1516 = vadd.f32 %v1488, %v1508
    %v1517 = vadd.f32 %v1489, %v1509
    %v1518 = vadd.f32 %v1490, %v1510
    %v1519 = vadd.f32 %v1491, %v1511
    %v1520 = vadd.f32 %v1492, %v1512
    %v1521 = vadd.f32 %v1493, %v1513
    %v1522 = vadd.f32 %v1494, %v1514
    %v1523 = vadd.f32 %v1071, %v1515
    %v1524 = vadd.f32 %v1072, %v1516
    %v1525 = vadd.f32 %v1073, %v1517
    %v1526 = vadd.f32 %v1074, %v1518
    %v1527 = vadd.f32 %v1075, %v1519
    %v1528 = vadd.f32 %v1076, %v1520
    %v1529 = vadd.f32 %v1077, %v1521
    %v1530 = vadd.f32 %v1078, %v1522
    %1531 = vrot.lane.b32.xlu0 %v179, 127
    %v1532 = vpop.permute.xlu0 %1531
    %1533 = vrot.lane.b32.xlu0 %v183, 127
    %v1534 = vpop.permute.xlu0 %1533
    %1535 = vrot.lane.b32.xlu0 %v180, 127
    %v1536 = vpop.permute.xlu0 %1535
    %1537 = vrot.lane.b32.xlu0 %v184, 127
    %v1538 = vpop.permute.xlu0 %1537
    %1539 = vrot.lane.b32.xlu0 %v181, 127
    %v1540 = vpop.permute.xlu0 %1539
    %1541 = vrot.lane.b32.xlu0 %v185, 127
    %v1542 = vpop.permute.xlu0 %1541
    %1543 = vrot.lane.b32.xlu0 %v182, 127
    %v1544 = vpop.permute.xlu0 %1543
    %1545 = vrot.lane.b32.xlu0 %v186, 127
    %v1546 = vpop.permute.xlu0 %1545
    %vm1547 = vcmp.lt.s32.totalorder %v271, 127
    %v1548 = vsel %vm1547, %v1540, %v1544
    %v1549 = vsel %vm1547, %v1542, %v1546
    %v1550 = vsel %vm1547, %v1536, %v1540
    %v1551 = vsel %vm1547, %v1538, %v1542
    %v1552 = vsel %vm1547, %v1532, %v1536
    %v1553 = vsel %vm1547, %v1534, %v1538
    %v1554 = vsel %vm1547, %v1544, %v1532
    %v1555 = vsel %vm1547, %v1546, %v1534
    %s1556 = scalar_lea.vmem %s1, 4
    %v1557 = vld [vmem:[%s1556] ss:$8 sm:$0xf]
    %v1559 = vperm.slane %v1557, 0
    %v1560 = vperm.slane %v1557, 1
    %v1561 = vperm.slane %v1557, 2
    %v1562 = vperm.slane %v1557, 3
    %v1567 = vmul.f32 %v1552, %v1559
    %v1568 = vmul.f32 %v1550, %v1560
    %v1569 = vmul.f32 %v1548, %v1561
    %v1570 = vmul.f32 %v1554, %v1562
    %v1571 = vmul.f32 %v1553, %v1559
    %v1572 = vmul.f32 %v1551, %v1560
    %v1573 = vmul.f32 %v1549, %v1561
    %v1574 = vmul.f32 %v1555, %v1562
    %v1575 = vld [vmem:[%s0 + $0x70] sm:$0xff]
    %v1576 = vld [vmem:[%s0 + $0x78] sm:$0xff]
    %1578 = vset.pattern.permute.xlu0 0
    %1579 = vperm.xlu0 %1578, %v1575
    %v1580 = vpop.permute.xlu0 %1579
    %1583 = vset.pattern.permute.xlu0 0
    %1584 = vperm.xlu0 %1583, %v1576
    %v1585 = vpop.permute.xlu0 %1584
    %v1587 = vperm.slane %v1567, 0
    %v1588 = vperm.slane %v1568, 0
    %v1589 = vperm.slane %v1569, 0
    %v1590 = vperm.slane %v1570, 0
    %v1591 = vmul.f32 %v1580, %v1587
    %v1592 = vmul.f32 %v1580, %v1588
    %v1593 = vmul.f32 %v1580, %v1589
    %v1594 = vmul.f32 %v1580, %v1590
    %v1595 = vmul.f32 %v1585, %v1587
    %v1596 = vmul.f32 %v1585, %v1588
    %v1597 = vmul.f32 %v1585, %v1589
    %v1598 = vmul.f32 %v1585, %v1590
    %1599 = vset.pattern.permute.xlu0 1
    %1600 = vperm.xlu0 %1599, %v1575
    %v1601 = vpop.permute.xlu0 %1600
    %1603 = vset.pattern.permute.xlu0 1
    %1604 = vperm.xlu0 %1603, %v1576
    %v1605 = vpop.permute.xlu0 %1604
    %v1607 = vperm.slane %v1567, 1
    %v1608 = vperm.slane %v1568, 1
    %v1609 = vperm.slane %v1569, 1
    %v1610 = vperm.slane %v1570, 1
    %v1611 = vmul.f32 %v1601, %v1607
    %v1612 = vmul.f32 %v1601, %v1608
    %v1613 = vmul.f32 %v1601, %v1609
    %v1614 = vmul.f32 %v1601, %v1610
    %v1615 = vmul.f32 %v1605, %v1607
    %v1616 = vmul.f32 %v1605, %v1608
    %v1617 = vmul.f32 %v1605, %v1609
    %v1618 = vmul.f32 %v1605, %v1610
    %v1619 = vadd.f32 %v1591, %v1611
    %v1620 = vadd.f32 %v1592, %v1612
    %v1621 = vadd.f32 %v1593, %v1613
    %v1622 = vadd.f32 %v1594, %v1614
    %v1623 = vadd.f32 %v1595, %v1615
    %v1624 = vadd.f32 %v1596, %v1616
    %v1625 = vadd.f32 %v1597, %v1617
    %v1626 = vadd.f32 %v1598, %v1618
    %1627 = vset.pattern.permute.xlu0 2
    %1628 = vperm.xlu0 %1627, %v1575
    %v1629 = vpop.permute.xlu0 %1628
    %1631 = vset.pattern.permute.xlu0 2
    %1632 = vperm.xlu0 %1631, %v1576
    %v1633 = vpop.permute.xlu0 %1632
    %v1635 = vperm.slane %v1567, 2
    %v1636 = vperm.slane %v1568, 2
    %v1637 = vperm.slane %v1569, 2
    %v1638 = vperm.slane %v1570, 2
    %v1639 = vmul.f32 %v1629, %v1635
    %v1640 = vmul.f32 %v1629, %v1636
    %v1641 = vmul.f32 %v1629, %v1637
    %v1642 = vmul.f32 %v1629, %v1638
    %v1643 = vmul.f32 %v1633, %v1635
    %v1644 = vmul.f32 %v1633, %v1636
    %v1645 = vmul.f32 %v1633, %v1637
    %v1646 = vmul.f32 %v1633, %v1638
    %v1647 = vadd.f32 %v1619, %v1639
    %v1648 = vadd.f32 %v1620, %v1640
    %v1649 = vadd.f32 %v1621, %v1641
    %v1650 = vadd.f32 %v1622, %v1642
    %v1651 = vadd.f32 %v1623, %v1643
    %v1652 = vadd.f32 %v1624, %v1644
    %v1653 = vadd.f32 %v1625, %v1645
    %v1654 = vadd.f32 %v1626, %v1646
    %1655 = vset.pattern.permute.xlu0 3
    %1656 = vperm.xlu0 %1655, %v1575
    %v1657 = vpop.permute.xlu0 %1656
    %1659 = vset.pattern.permute.xlu0 3
    %1660 = vperm.xlu0 %1659, %v1576
    %v1661 = vpop.permute.xlu0 %1660
    %v1663 = vperm.slane %v1567, 3
    %v1664 = vperm.slane %v1568, 3
    %v1665 = vperm.slane %v1569, 3
    %v1666 = vperm.slane %v1570, 3
    %v1667 = vmul.f32 %v1657, %v1663
    %v1668 = vmul.f32 %v1657, %v1664
    %v1669 = vmul.f32 %v1657, %v1665
    %v1670 = vmul.f32 %v1657, %v1666
    %v1671 = vmul.f32 %v1661, %v1663
    %v1672 = vmul.f32 %v1661, %v1664
    %v1673 = vmul.f32 %v1661, %v1665
    %v1674 = vmul.f32 %v1661, %v1666
    %v1675 = vadd.f32 %v1647, %v1667
    %v1676 = vadd.f32 %v1648, %v1668
    %v1677 = vadd.f32 %v1649, %v1669
    %v1678 = vadd.f32 %v1650, %v1670
    %v1679 = vadd.f32 %v1651, %v1671
    %v1680 = vadd.f32 %v1652, %v1672
    %v1681 = vadd.f32 %v1653, %v1673
    %v1682 = vadd.f32 %v1654, %v1674
    %1683 = vset.pattern.permute.xlu0 8
    %1684 = vperm.xlu0 %1683, %v1575
    %v1685 = vpop.permute.xlu0 %1684
    %1687 = vset.pattern.permute.xlu0 8
    %1688 = vperm.xlu0 %1687, %v1576
    %v1689 = vpop.permute.xlu0 %1688
    %v1691 = vperm.slane %v1571, 0
    %v1692 = vperm.slane %v1572, 0
    %v1693 = vperm.slane %v1573, 0
    %v1694 = vperm.slane %v1574, 0
    %v1695 = vmul.f32 %v1685, %v1691
    %v1696 = vmul.f32 %v1685, %v1692
    %v1697 = vmul.f32 %v1685, %v1693
    %v1698 = vmul.f32 %v1685, %v1694
    %v1699 = vmul.f32 %v1689, %v1691
    %v1700 = vmul.f32 %v1689, %v1692
    %v1701 = vmul.f32 %v1689, %v1693
    %v1702 = vmul.f32 %v1689, %v1694
    %v1703 = vadd.f32 %v1675, %v1695
    %v1704 = vadd.f32 %v1676, %v1696
    %v1705 = vadd.f32 %v1677, %v1697
    %v1706 = vadd.f32 %v1678, %v1698
    %v1707 = vadd.f32 %v1679, %v1699
    %v1708 = vadd.f32 %v1680, %v1700
    %v1709 = vadd.f32 %v1681, %v1701
    %v1710 = vadd.f32 %v1682, %v1702
    %1711 = vset.pattern.permute.xlu0 9
    %1712 = vperm.xlu0 %1711, %v1575
    %v1713 = vpop.permute.xlu0 %1712
    %1715 = vset.pattern.permute.xlu0 9
    %1716 = vperm.xlu0 %1715, %v1576
    %v1717 = vpop.permute.xlu0 %1716
    %v1719 = vperm.slane %v1571, 1
    %v1720 = vperm.slane %v1572, 1
    %v1721 = vperm.slane %v1573, 1
    %v1722 = vperm.slane %v1574, 1
    %v1723 = vmul.f32 %v1713, %v1719
    %v1724 = vmul.f32 %v1713, %v1720
    %v1725 = vmul.f32 %v1713, %v1721
    %v1726 = vmul.f32 %v1713, %v1722
    %v1727 = vmul.f32 %v1717, %v1719
    %v1728 = vmul.f32 %v1717, %v1720
    %v1729 = vmul.f32 %v1717, %v1721
    %v1730 = vmul.f32 %v1717, %v1722
    %v1731 = vadd.f32 %v1703, %v1723
    %v1732 = vadd.f32 %v1704, %v1724
    %v1733 = vadd.f32 %v1705, %v1725
    %v1734 = vadd.f32 %v1706, %v1726
    %v1735 = vadd.f32 %v1707, %v1727
    %v1736 = vadd.f32 %v1708, %v1728
    %v1737 = vadd.f32 %v1709, %v1729
    %v1738 = vadd.f32 %v1710, %v1730
    %1739 = vset.pattern.permute.xlu0 10
    %1740 = vperm.xlu0 %1739, %v1575
    %v1741 = vpop.permute.xlu0 %1740
    %1743 = vset.pattern.permute.xlu0 10
    %1744 = vperm.xlu0 %1743, %v1576
    %v1745 = vpop.permute.xlu0 %1744
    %v1747 = vperm.slane %v1571, 2
    %v1748 = vperm.slane %v1572, 2
    %v1749 = vperm.slane %v1573, 2
    %v1750 = vperm.slane %v1574, 2
    %v1751 = vmul.f32 %v1741, %v1747
    %v1752 = vmul.f32 %v1741, %v1748
    %v1753 = vmul.f32 %v1741, %v1749
    %v1754 = vmul.f32 %v1741, %v1750
    %v1755 = vmul.f32 %v1745, %v1747
    %v1756 = vmul.f32 %v1745, %v1748
    %v1757 = vmul.f32 %v1745, %v1749
    %v1758 = vmul.f32 %v1745, %v1750
    %v1759 = vadd.f32 %v1731, %v1751
    %v1760 = vadd.f32 %v1732, %v1752
    %v1761 = vadd.f32 %v1733, %v1753
    %v1762 = vadd.f32 %v1734, %v1754
    %v1763 = vadd.f32 %v1735, %v1755
    %v1764 = vadd.f32 %v1736, %v1756
    %v1765 = vadd.f32 %v1737, %v1757
    %v1766 = vadd.f32 %v1738, %v1758
    %1767 = vset.pattern.permute.xlu0 11
    %1768 = vperm.xlu0 %1767, %v1575
    %v1769 = vpop.permute.xlu0 %1768
    %1771 = vset.pattern.permute.xlu0 11
    %1772 = vperm.xlu0 %1771, %v1576
    %v1773 = vpop.permute.xlu0 %1772
    %v1775 = vperm.slane %v1571, 3
    %v1776 = vperm.slane %v1572, 3
    %v1777 = vperm.slane %v1573, 3
    %v1778 = vperm.slane %v1574, 3
    %v1779 = vmul.f32 %v1769, %v1775
    %v1780 = vmul.f32 %v1769, %v1776
    %v1781 = vmul.f32 %v1769, %v1777
    %v1782 = vmul.f32 %v1769, %v1778
    %v1783 = vmul.f32 %v1773, %v1775
    %v1784 = vmul.f32 %v1773, %v1776
    %v1785 = vmul.f32 %v1773, %v1777
    %v1786 = vmul.f32 %v1773, %v1778
    %v1787 = vadd.f32 %v1759, %v1779
    %v1788 = vadd.f32 %v1760, %v1780
    %v1789 = vadd.f32 %v1761, %v1781
    %v1790 = vadd.f32 %v1762, %v1782
    %v1791 = vadd.f32 %v1763, %v1783
    %v1792 = vadd.f32 %v1764, %v1784
    %v1793 = vadd.f32 %v1765, %v1785
    %v1794 = vadd.f32 %v1766, %v1786
    %v1795 = vadd.f32 %v1523, %v1787
    %v1796 = vadd.f32 %v1524, %v1788
    %v1797 = vadd.f32 %v1525, %v1789
    %v1798 = vadd.f32 %v1526, %v1790
    %v1799 = vadd.f32 %v1527, %v1791
    %v1800 = vadd.f32 %v1528, %v1792
    %v1801 = vadd.f32 %v1529, %v1793
    %v1802 = vadd.f32 %v1530, %v1794
    %1803 = vrot.lane.b32.xlu0 %v179, 113
    %v1804 = vpop.permute.xlu0 %1803
    %1805 = vrot.lane.b32.xlu0 %v180, 113
    %v1806 = vpop.permute.xlu0 %1805
    %1807 = vrot.lane.b32.xlu0 %v181, 113
    %v1808 = vpop.permute.xlu0 %1807
    %1809 = vrot.lane.b32.xlu0 %v182, 113
    %v1810 = vpop.permute.xlu0 %1809
    %vm1811 = vcmp.lt.s32.totalorder %v271, 113
    %v1812 = vsel %vm1811, %v1808, %v1810
    %v1813 = vsel %vm1811, %v1806, %v1808
    %v1814 = vsel %vm1811, %v1804, %v1806
    %v1815 = vsel %vm1811, %v1810, %v1804
    %s1816 = scalar_lea.vmem %s1, 5
    %v1817 = vld [vmem:[%s1816] ss:$8 sm:$0xf]
    %v1819 = vperm.slane %v1817, 0
    %v1820 = vperm.slane %v1817, 1
    %v1821 = vperm.slane %v1817, 2
    %v1822 = vperm.slane %v1817, 3
    %v1827 = vmul.f32 %v1814, %v1819
    %v1828 = vmul.f32 %v1813, %v1820
    %v1829 = vmul.f32 %v1812, %v1821
    %v1830 = vmul.f32 %v1815, %v1822
    %v1831 = vld [vmem:[%s0 + $0x80] sm:$0xff]
    %v1832 = vld [vmem:[%s0 + $0x88] sm:$0xff]
    %1834 = vset.pattern.permute.xlu0 4
    %1835 = vperm.xlu0 %1834, %v1831
    %v1836 = vpop.permute.xlu0 %1835
    %1839 = vset.pattern.permute.xlu0 4
    %1840 = vperm.xlu0 %1839, %v1832
    %v1841 = vpop.permute.xlu0 %1840
    %v1843 = vperm.slane %v1827, 4
    %v1844 = vperm.slane %v1828, 4
    %v1845 = vperm.slane %v1829, 4
    %v1846 = vperm.slane %v1830, 4
    %v1847 = vmul.f32 %v1836, %v1843
    %v1848 = vmul.f32 %v1836, %v1844
    %v1849 = vmul.f32 %v1836, %v1845
    %v1850 = vmul.f32 %v1836, %v1846
    %v1851 = vmul.f32 %v1841, %v1843
    %v1852 = vmul.f32 %v1841, %v1844
    %v1853 = vmul.f32 %v1841, %v1845
    %v1854 = vmul.f32 %v1841, %v1846
    %1855 = vset.pattern.permute.xlu0 5
    %1856 = vperm.xlu0 %1855, %v1831
    %v1857 = vpop.permute.xlu0 %1856
    %1859 = vset.pattern.permute.xlu0 5
    %1860 = vperm.xlu0 %1859, %v1832
    %v1861 = vpop.permute.xlu0 %1860
    %v1863 = vperm.slane %v1827, 5
    %v1864 = vperm.slane %v1828, 5
    %v1865 = vperm.slane %v1829, 5
    %v1866 = vperm.slane %v1830, 5
    %v1867 = vmul.f32 %v1857, %v1863
    %v1868 = vmul.f32 %v1857, %v1864
    %v1869 = vmul.f32 %v1857, %v1865
    %v1870 = vmul.f32 %v1857, %v1866
    %v1871 = vmul.f32 %v1861, %v1863
    %v1872 = vmul.f32 %v1861, %v1864
    %v1873 = vmul.f32 %v1861, %v1865
    %v1874 = vmul.f32 %v1861, %v1866
    %v1875 = vadd.f32 %v1847, %v1867
    %v1876 = vadd.f32 %v1848, %v1868
    %v1877 = vadd.f32 %v1849, %v1869
    %v1878 = vadd.f32 %v1850, %v1870
    %v1879 = vadd.f32 %v1851, %v1871
    %v1880 = vadd.f32 %v1852, %v1872
    %v1881 = vadd.f32 %v1853, %v1873
    %v1882 = vadd.f32 %v1854, %v1874
    %1883 = vset.pattern.permute.xlu0 6
    %1884 = vperm.xlu0 %1883, %v1831
    %v1885 = vpop.permute.xlu0 %1884
    %1887 = vset.pattern.permute.xlu0 6
    %1888 = vperm.xlu0 %1887, %v1832
    %v1889 = vpop.permute.xlu0 %1888
    %v1891 = vperm.slane %v1827, 6
    %v1892 = vperm.slane %v1828, 6
    %v1893 = vperm.slane %v1829, 6
    %v1894 = vperm.slane %v1830, 6
    %v1895 = vmul.f32 %v1885, %v1891
    %v1896 = vmul.f32 %v1885, %v1892
    %v1897 = vmul.f32 %v1885, %v1893
    %v1898 = vmul.f32 %v1885, %v1894
    %v1899 = vmul.f32 %v1889, %v1891
    %v1900 = vmul.f32 %v1889, %v1892
    %v1901 = vmul.f32 %v1889, %v1893
    %v1902 = vmul.f32 %v1889, %v1894
    %v1903 = vadd.f32 %v1875, %v1895
    %v1904 = vadd.f32 %v1876, %v1896
    %v1905 = vadd.f32 %v1877, %v1897
    %v1906 = vadd.f32 %v1878, %v1898
    %v1907 = vadd.f32 %v1879, %v1899
    %v1908 = vadd.f32 %v1880, %v1900
    %v1909 = vadd.f32 %v1881, %v1901
    %v1910 = vadd.f32 %v1882, %v1902
    %1911 = vset.pattern.permute.xlu0 7
    %1912 = vperm.xlu0 %1911, %v1831
    %v1913 = vpop.permute.xlu0 %1912
    %1915 = vset.pattern.permute.xlu0 7
    %1916 = vperm.xlu0 %1915, %v1832
    %v1917 = vpop.permute.xlu0 %1916
    %v1919 = vperm.slane %v1827, 7
    %v1920 = vperm.slane %v1828, 7
    %v1921 = vperm.slane %v1829, 7
    %v1922 = vperm.slane %v1830, 7
    %v1923 = vmul.f32 %v1913, %v1919
    %v1924 = vmul.f32 %v1913, %v1920
    %v1925 = vmul.f32 %v1913, %v1921
    %v1926 = vmul.f32 %v1913, %v1922
    %v1927 = vmul.f32 %v1917, %v1919
    %v1928 = vmul.f32 %v1917, %v1920
    %v1929 = vmul.f32 %v1917, %v1921
    %v1930 = vmul.f32 %v1917, %v1922
    %v1931 = vadd.f32 %v1903, %v1923
    %v1932 = vadd.f32 %v1904, %v1924
    %v1933 = vadd.f32 %v1905, %v1925
    %v1934 = vadd.f32 %v1906, %v1926
    %v1935 = vadd.f32 %v1907, %v1927
    %v1936 = vadd.f32 %v1908, %v1928
    %v1937 = vadd.f32 %v1909, %v1929
    %v1938 = vadd.f32 %v1910, %v1930
    %v1939 = vadd.f32 %v1795, %v1931
    %v1940 = vadd.f32 %v1796, %v1932
    %v1941 = vadd.f32 %v1797, %v1933
    %v1942 = vadd.f32 %v1798, %v1934
    %v1943 = vadd.f32 %v1799, %v1935
    %v1944 = vadd.f32 %v1800, %v1936
    %v1945 = vadd.f32 %v1801, %v1937
    %v1946 = vadd.f32 %v1802, %v1938
    %1947 = vrot.lane.b32.xlu0 %v179, 112
    %v1948 = vpop.permute.xlu0 %1947
    %1949 = vrot.lane.b32.xlu0 %v180, 112
    %v1950 = vpop.permute.xlu0 %1949
    %1951 = vrot.lane.b32.xlu0 %v181, 112
    %v1952 = vpop.permute.xlu0 %1951
    %1953 = vrot.lane.b32.xlu0 %v182, 112
    %v1954 = vpop.permute.xlu0 %1953
    %vm1955 = vcmp.lt.s32.totalorder %v271, 112
    %v1956 = vsel %vm1955, %v1952, %v1954
    %v1957 = vsel %vm1955, %v1950, %v1952
    %v1958 = vsel %vm1955, %v1948, %v1950
    %v1959 = vsel %vm1955, %v1954, %v1948
    %s1960 = scalar_lea.vmem %s1, 6
    %v1961 = vld [vmem:[%s1960] ss:$8 sm:$0xf]
    %v1963 = vperm.slane %v1961, 0
    %v1964 = vperm.slane %v1961, 1
    %v1965 = vperm.slane %v1961, 2
    %v1966 = vperm.slane %v1961, 3
    %v1971 = vmul.f32 %v1958, %v1963
    %v1972 = vmul.f32 %v1957, %v1964
    %v1973 = vmul.f32 %v1956, %v1965
    %v1974 = vmul.f32 %v1959, %v1966
    %v1975 = vld [vmem:[%s0 + $0x90] sm:$0xff]
    %v1976 = vld [vmem:[%s0 + $0x98] sm:$0xff]
    %1978 = vset.pattern.permute.xlu0 0
    %1979 = vperm.xlu0 %1978, %v1975
    %v1980 = vpop.permute.xlu0 %1979
    %1983 = vset.pattern.permute.xlu0 0
    %1984 = vperm.xlu0 %1983, %v1976
    %v1985 = vpop.permute.xlu0 %1984
    %v1987 = vperm.slane %v1971, 0
    %v1988 = vperm.slane %v1972, 0
    %v1989 = vperm.slane %v1973, 0
    %v1990 = vperm.slane %v1974, 0
    %v1991 = vmul.f32 %v1980, %v1987
    %v1992 = vmul.f32 %v1980, %v1988
    %v1993 = vmul.f32 %v1980, %v1989
    %v1994 = vmul.f32 %v1980, %v1990
    %v1995 = vmul.f32 %v1985, %v1987
    %v1996 = vmul.f32 %v1985, %v1988
    %v1997 = vmul.f32 %v1985, %v1989
    %v1998 = vmul.f32 %v1985, %v1990
    %1999 = vset.pattern.permute.xlu0 1
    %2000 = vperm.xlu0 %1999, %v1975
    %v2001 = vpop.permute.xlu0 %2000
    %2003 = vset.pattern.permute.xlu0 1
    %2004 = vperm.xlu0 %2003, %v1976
    %v2005 = vpop.permute.xlu0 %2004
    %v2007 = vperm.slane %v1971, 1
    %v2008 = vperm.slane %v1972, 1
    %v2009 = vperm.slane %v1973, 1
    %v2010 = vperm.slane %v1974, 1
    %v2011 = vmul.f32 %v2001, %v2007
    %v2012 = vmul.f32 %v2001, %v2008
    %v2013 = vmul.f32 %v2001, %v2009
    %v2014 = vmul.f32 %v2001, %v2010
    %v2015 = vmul.f32 %v2005, %v2007
    %v2016 = vmul.f32 %v2005, %v2008
    %v2017 = vmul.f32 %v2005, %v2009
    %v2018 = vmul.f32 %v2005, %v2010
    %v2019 = vadd.f32 %v1991, %v2011
    %v2020 = vadd.f32 %v1992, %v2012
    %v2021 = vadd.f32 %v1993, %v2013
    %v2022 = vadd.f32 %v1994, %v2014
    %v2023 = vadd.f32 %v1995, %v2015
    %v2024 = vadd.f32 %v1996, %v2016
    %v2025 = vadd.f32 %v1997, %v2017
    %v2026 = vadd.f32 %v1998, %v2018
    %2027 = vset.pattern.permute.xlu0 2
    %2028 = vperm.xlu0 %2027, %v1975
    %v2029 = vpop.permute.xlu0 %2028
    %2031 = vset.pattern.permute.xlu0 2
    %2032 = vperm.xlu0 %2031, %v1976
    %v2033 = vpop.permute.xlu0 %2032
    %v2035 = vperm.slane %v1971, 2
    %v2036 = vperm.slane %v1972, 2
    %v2037 = vperm.slane %v1973, 2
    %v2038 = vperm.slane %v1974, 2
    %v2039 = vmul.f32 %v2029, %v2035
    %v2040 = vmul.f32 %v2029, %v2036
    %v2041 = vmul.f32 %v2029, %v2037
    %v2042 = vmul.f32 %v2029, %v2038
    %v2043 = vmul.f32 %v2033, %v2035
    %v2044 = vmul.f32 %v2033, %v2036
    %v2045 = vmul.f32 %v2033, %v2037
    %v2046 = vmul.f32 %v2033, %v2038
    %v2047 = vadd.f32 %v2019, %v2039
    %v2048 = vadd.f32 %v2020, %v2040
    %v2049 = vadd.f32 %v2021, %v2041
    %v2050 = vadd.f32 %v2022, %v2042
    %v2051 = vadd.f32 %v2023, %v2043
    %v2052 = vadd.f32 %v2024, %v2044
    %v2053 = vadd.f32 %v2025, %v2045
    %v2054 = vadd.f32 %v2026, %v2046
    %2055 = vset.pattern.permute.xlu0 3
    %2056 = vperm.xlu0 %2055, %v1975
    %v2057 = vpop.permute.xlu0 %2056
    %2059 = vset.pattern.permute.xlu0 3
    %2060 = vperm.xlu0 %2059, %v1976
    %v2061 = vpop.permute.xlu0 %2060
    %v2063 = vperm.slane %v1971, 3
    %v2064 = vperm.slane %v1972, 3
    %v2065 = vperm.slane %v1973, 3
    %v2066 = vperm.slane %v1974, 3
    %v2067 = vmul.f32 %v2057, %v2063
    %v2068 = vmul.f32 %v2057, %v2064
    %v2069 = vmul.f32 %v2057, %v2065
    %v2070 = vmul.f32 %v2057, %v2066
    %v2071 = vmul.f32 %v2061, %v2063
    %v2072 = vmul.f32 %v2061, %v2064
    %v2073 = vmul.f32 %v2061, %v2065
    %v2074 = vmul.f32 %v2061, %v2066
    %v2075 = vadd.f32 %v2047, %v2067
    %v2076 = vadd.f32 %v2048, %v2068
    %v2077 = vadd.f32 %v2049, %v2069
    %v2078 = vadd.f32 %v2050, %v2070
    %v2079 = vadd.f32 %v2051, %v2071
    %v2080 = vadd.f32 %v2052, %v2072
    %v2081 = vadd.f32 %v2053, %v2073
    %v2082 = vadd.f32 %v2054, %v2074
    %2083 = vset.pattern.permute.xlu0 4
    %2084 = vperm.xlu0 %2083, %v1975
    %v2085 = vpop.permute.xlu0 %2084
    %2087 = vset.pattern.permute.xlu0 4
    %2088 = vperm.xlu0 %2087, %v1976
    %v2089 = vpop.permute.xlu0 %2088
    %v2091 = vperm.slane %v1971, 4
    %v2092 = vperm.slane %v1972, 4
    %v2093 = vperm.slane %v1973, 4
    %v2094 = vperm.slane %v1974, 4
    %v2095 = vmul.f32 %v2085, %v2091
    %v2096 = vmul.f32 %v2085, %v2092
    %v2097 = vmul.f32 %v2085, %v2093
    %v2098 = vmul.f32 %v2085, %v2094
    %v2099 = vmul.f32 %v2089, %v2091
    %v2100 = vmul.f32 %v2089, %v2092
    %v2101 = vmul.f32 %v2089, %v2093
    %v2102 = vmul.f32 %v2089, %v2094
    %v2103 = vadd.f32 %v2075, %v2095
    %v2104 = vadd.f32 %v2076, %v2096
    %v2105 = vadd.f32 %v2077, %v2097
    %v2106 = vadd.f32 %v2078, %v2098
    %v2107 = vadd.f32 %v2079, %v2099
    %v2108 = vadd.f32 %v2080, %v2100
    %v2109 = vadd.f32 %v2081, %v2101
    %v2110 = vadd.f32 %v2082, %v2102
    %2111 = vset.pattern.permute.xlu0 5
    %2112 = vperm.xlu0 %2111, %v1975
    %v2113 = vpop.permute.xlu0 %2112
    %2115 = vset.pattern.permute.xlu0 5
    %2116 = vperm.xlu0 %2115, %v1976
    %v2117 = vpop.permute.xlu0 %2116
    %v2119 = vperm.slane %v1971, 5
    %v2120 = vperm.slane %v1972, 5
    %v2121 = vperm.slane %v1973, 5
    %v2122 = vperm.slane %v1974, 5
    %v2123 = vmul.f32 %v2113, %v2119
    %v2124 = vmul.f32 %v2113, %v2120
    %v2125 = vmul.f32 %v2113, %v2121
    %v2126 = vmul.f32 %v2113, %v2122
    %v2127 = vmul.f32 %v2117, %v2119
    %v2128 = vmul.f32 %v2117, %v2120
    %v2129 = vmul.f32 %v2117, %v2121
    %v2130 = vmul.f32 %v2117, %v2122
    %v2131 = vadd.f32 %v2103, %v2123
    %v2132 = vadd.f32 %v2104, %v2124
    %v2133 = vadd.f32 %v2105, %v2125
    %v2134 = vadd.f32 %v2106, %v2126
    %v2135 = vadd.f32 %v2107, %v2127
    %v2136 = vadd.f32 %v2108, %v2128
    %v2137 = vadd.f32 %v2109, %v2129
    %v2138 = vadd.f32 %v2110, %v2130
    %2139 = vset.pattern.permute.xlu0 6
    %2140 = vperm.xlu0 %2139, %v1975
    %v2141 = vpop.permute.xlu0 %2140
    %2143 = vset.pattern.permute.xlu0 6
    %2144 = vperm.xlu0 %2143, %v1976
    %v2145 = vpop.permute.xlu0 %2144
    %v2147 = vperm.slane %v1971, 6
    %v2148 = vperm.slane %v1972, 6
    %v2149 = vperm.slane %v1973, 6
    %v2150 = vperm.slane %v1974, 6
    %v2151 = vmul.f32 %v2141, %v2147
    %v2152 = vmul.f32 %v2141, %v2148
    %v2153 = vmul.f32 %v2141, %v2149
    %v2154 = vmul.f32 %v2141, %v2150
    %v2155 = vmul.f32 %v2145, %v2147
    %v2156 = vmul.f32 %v2145, %v2148
    %v2157 = vmul.f32 %v2145, %v2149
    %v2158 = vmul.f32 %v2145, %v2150
    %v2159 = vadd.f32 %v2131, %v2151
    %v2160 = vadd.f32 %v2132, %v2152
    %v2161 = vadd.f32 %v2133, %v2153
    %v2162 = vadd.f32 %v2134, %v2154
    %v2163 = vadd.f32 %v2135, %v2155
    %v2164 = vadd.f32 %v2136, %v2156
    %v2165 = vadd.f32 %v2137, %v2157
    %v2166 = vadd.f32 %v2138, %v2158
    %2167 = vset.pattern.permute.xlu0 7
    %2168 = vperm.xlu0 %2167, %v1975
    %v2169 = vpop.permute.xlu0 %2168
    %2171 = vset.pattern.permute.xlu0 7
    %2172 = vperm.xlu0 %2171, %v1976
    %v2173 = vpop.permute.xlu0 %2172
    %v2175 = vperm.slane %v1971, 7
    %v2176 = vperm.slane %v1972, 7
    %v2177 = vperm.slane %v1973, 7
    %v2178 = vperm.slane %v1974, 7
    %v2179 = vmul.f32 %v2169, %v2175
    %v2180 = vmul.f32 %v2169, %v2176
    %v2181 = vmul.f32 %v2169, %v2177
    %v2182 = vmul.f32 %v2169, %v2178
    %v2183 = vmul.f32 %v2173, %v2175
    %v2184 = vmul.f32 %v2173, %v2176
    %v2185 = vmul.f32 %v2173, %v2177
    %v2186 = vmul.f32 %v2173, %v2178
    %v2187 = vadd.f32 %v2159, %v2179
    %v2188 = vadd.f32 %v2160, %v2180
    %v2189 = vadd.f32 %v2161, %v2181
    %v2190 = vadd.f32 %v2162, %v2182
    %v2191 = vadd.f32 %v2163, %v2183
    %v2192 = vadd.f32 %v2164, %v2184
    %v2193 = vadd.f32 %v2165, %v2185
    %v2194 = vadd.f32 %v2166, %v2186
    %v2195 = vadd.f32 %v1939, %v2187
    %v2196 = vadd.f32 %v1940, %v2188
    %v2197 = vadd.f32 %v1941, %v2189
    %v2198 = vadd.f32 %v1942, %v2190
    %v2199 = vadd.f32 %v1943, %v2191
    %v2200 = vadd.f32 %v1944, %v2192
    %v2201 = vadd.f32 %v1945, %v2193
    %v2202 = vadd.f32 %v1946, %v2194
    %2203 = vrot.lane.b32.xlu0 %v179, 111
    %v2204 = vpop.permute.xlu0 %2203
    %2205 = vrot.lane.b32.xlu0 %v180, 111
    %v2206 = vpop.permute.xlu0 %2205
    %2207 = vrot.lane.b32.xlu0 %v181, 111
    %v2208 = vpop.permute.xlu0 %2207
    %2209 = vrot.lane.b32.xlu0 %v182, 111
    %v2210 = vpop.permute.xlu0 %2209
    %vm2211 = vcmp.lt.s32.totalorder %v271, 111
    %v2212 = vsel %vm2211, %v2208, %v2210
    %v2213 = vsel %vm2211, %v2206, %v2208
    %v2214 = vsel %vm2211, %v2204, %v2206
    %v2215 = vsel %vm2211, %v2210, %v2204
    %s2216 = scalar_lea.vmem %s1, 7
    %v2217 = vld [vmem:[%s2216] ss:$8 sm:$0xf]
    %v2219 = vperm.slane %v2217, 0
    %v2220 = vperm.slane %v2217, 1
    %v2221 = vperm.slane %v2217, 2
    %v2222 = vperm.slane %v2217, 3
    %v2227 = vmul.f32 %v2214, %v2219
    %v2228 = vmul.f32 %v2213, %v2220
    %v2229 = vmul.f32 %v2212, %v2221
    %v2230 = vmul.f32 %v2215, %v2222
    %v2231 = vld [vmem:[%s0 + $0xa0] sm:$0xff]
    %v2232 = vld [vmem:[%s0 + $0xa8] sm:$0xff]
    %2234 = vset.pattern.permute.xlu0 0
    %2235 = vperm.xlu0 %2234, %v2231
    %v2236 = vpop.permute.xlu0 %2235
    %2239 = vset.pattern.permute.xlu0 0
    %2240 = vperm.xlu0 %2239, %v2232
    %v2241 = vpop.permute.xlu0 %2240
    %v2243 = vperm.slane %v2227, 0
    %v2244 = vperm.slane %v2228, 0
    %v2245 = vperm.slane %v2229, 0
    %v2246 = vperm.slane %v2230, 0
    %v2247 = vmul.f32 %v2236, %v2243
    %v2248 = vmul.f32 %v2236, %v2244
    %v2249 = vmul.f32 %v2236, %v2245
    %v2250 = vmul.f32 %v2236, %v2246
    %v2251 = vmul.f32 %v2241, %v2243
    %v2252 = vmul.f32 %v2241, %v2244
    %v2253 = vmul.f32 %v2241, %v2245
    %v2254 = vmul.f32 %v2241, %v2246
    %2255 = vset.pattern.permute.xlu0 1
    %2256 = vperm.xlu0 %2255, %v2231
    %v2257 = vpop.permute.xlu0 %2256
    %2259 = vset.pattern.permute.xlu0 1
    %2260 = vperm.xlu0 %2259, %v2232
    %v2261 = vpop.permute.xlu0 %2260
    %v2263 = vperm.slane %v2227, 1
    %v2264 = vperm.slane %v2228, 1
    %v2265 = vperm.slane %v2229, 1
    %v2266 = vperm.slane %v2230, 1
    %v2267 = vmul.f32 %v2257, %v2263
    %v2268 = vmul.f32 %v2257, %v2264
    %v2269 = vmul.f32 %v2257, %v2265
    %v2270 = vmul.f32 %v2257, %v2266
    %v2271 = vmul.f32 %v2261, %v2263
    %v2272 = vmul.f32 %v2261, %v2264
    %v2273 = vmul.f32 %v2261, %v2265
    %v2274 = vmul.f32 %v2261, %v2266
    %v2275 = vadd.f32 %v2247, %v2267
    %v2276 = vadd.f32 %v2248, %v2268
    %v2277 = vadd.f32 %v2249, %v2269
    %v2278 = vadd.f32 %v2250, %v2270
    %v2279 = vadd.f32 %v2251, %v2271
    %v2280 = vadd.f32 %v2252, %v2272
    %v2281 = vadd.f32 %v2253, %v2273
    %v2282 = vadd.f32 %v2254, %v2274
    %2283 = vset.pattern.permute.xlu0 2
    %2284 = vperm.xlu0 %2283, %v2231
    %v2285 = vpop.permute.xlu0 %2284
    %2287 = vset.pattern.permute.xlu0 2
    %2288 = vperm.xlu0 %2287, %v2232
    %v2289 = vpop.permute.xlu0 %2288
    %v2291 = vperm.slane %v2227, 2
    %v2292 = vperm.slane %v2228, 2
    %v2293 = vperm.slane %v2229, 2
    %v2294 = vperm.slane %v2230, 2
    %v2295 = vmul.f32 %v2285, %v2291
    %v2296 = vmul.f32 %v2285, %v2292
    %v2297 = vmul.f32 %v2285, %v2293
    %v2298 = vmul.f32 %v2285, %v2294
    %v2299 = vmul.f32 %v2289, %v2291
    %v2300 = vmul.f32 %v2289, %v2292
    %v2301 = vmul.f32 %v2289, %v2293
    %v2302 = vmul.f32 %v2289, %v2294
    %v2303 = vadd.f32 %v2275, %v2295
    %v2304 = vadd.f32 %v2276, %v2296
    %v2305 = vadd.f32 %v2277, %v2297
    %v2306 = vadd.f32 %v2278, %v2298
    %v2307 = vadd.f32 %v2279, %v2299
    %v2308 = vadd.f32 %v2280, %v2300
    %v2309 = vadd.f32 %v2281, %v2301
    %v2310 = vadd.f32 %v2282, %v2302
    %2311 = vset.pattern.permute.xlu0 3
    %2312 = vperm.xlu0 %2311, %v2231
    %v2313 = vpop.permute.xlu0 %2312
    %2315 = vset.pattern.permute.xlu0 3
    %2316 = vperm.xlu0 %2315, %v2232
    %v2317 = vpop.permute.xlu0 %2316
    %v2319 = vperm.slane %v2227, 3
    %v2320 = vperm.slane %v2228, 3
    %v2321 = vperm.slane %v2229, 3
    %v2322 = vperm.slane %v2230, 3
    %v2323 = vmul.f32 %v2313, %v2319
    %v2324 = vmul.f32 %v2313, %v2320
    %v2325 = vmul.f32 %v2313, %v2321
    %v2326 = vmul.f32 %v2313, %v2322
    %v2327 = vmul.f32 %v2317, %v2319
    %v2328 = vmul.f32 %v2317, %v2320
    %v2329 = vmul.f32 %v2317, %v2321
    %v2330 = vmul.f32 %v2317, %v2322
    %v2331 = vadd.f32 %v2303, %v2323
    %v2332 = vadd.f32 %v2304, %v2324
    %v2333 = vadd.f32 %v2305, %v2325
    %v2334 = vadd.f32 %v2306, %v2326
    %v2335 = vadd.f32 %v2307, %v2327
    %v2336 = vadd.f32 %v2308, %v2328
    %v2337 = vadd.f32 %v2309, %v2329
    %v2338 = vadd.f32 %v2310, %v2330
    %v2339 = vadd.f32 %v2195, %v2331
    %v2340 = vadd.f32 %v2196, %v2332
    %v2341 = vadd.f32 %v2197, %v2333
    %v2342 = vadd.f32 %v2198, %v2334
    %v2343 = vadd.f32 %v2199, %v2335
    %v2344 = vadd.f32 %v2200, %v2336
    %v2345 = vadd.f32 %v2201, %v2337
    %v2346 = vadd.f32 %v2202, %v2338
    %2347 = vst [vmem:[#allocation2] sm:$0xff] %v2339
    %2348 = vst [vmem:[#allocation2 + $0x8] sm:$0xff] %v2340
    %2349 = vst [vmem:[#allocation2 + $0x10] sm:$0xff] %v2341
    %2350 = vst [vmem:[#allocation2 + $0x18] sm:$0xff] %v2342
    %2351 = vst [vmem:[#allocation2 + $0x20] sm:$0xff] %v2343
    %2352 = vst [vmem:[#allocation2 + $0x28] sm:$0xff] %v2344
    %2353 = vst [vmem:[#allocation2 + $0x30] sm:$0xff] %v2345
    %2354 = vst [vmem:[#allocation2 + $0x38] sm:$0xff] %v2346
    // Predicated region
    $region14: #{tpu_custom_call.1} parent=1 // pred_check
      _
    $region15: #{tpu_custom_call.1} parent=1 // pred_check_branch
      %2356 = sbr.rel (0) target = $region17
    $region16: #{tpu_custom_call.1} parent=1 // pred_region
      %2358 = vsyncadd [#allocation3], 0
      %s2359 = sshll.u32 [#allocation2], 4
      %s2360 = int_to_ptr.vmem [resolvable:$true] %s2359
      %s2361 = sshll.u32 %s3, 4
      %s2362 = int_to_ptr.hbm [resolvable:$true] %s2361
      %2367 = dma.vmem_to_hbm [thread:$0]  %s2360, 1024, %s2362, [#allocation3], 512, 512, 32
    $region17: #{tpu_custom_call.1} parent=1 // pred_fallthru
      _
    // Predicated region
    $region18: #{tpu_custom_call.1} parent=1 // pred_check
      _
    $region19: #{tpu_custom_call.1} parent=1 // pred_check_branch
      %2369 = sbr.rel (0) target = $region21
    $region20: #{tpu_custom_call.1} parent=1 // pred_region
      %2371 = dma.done [#allocation3], 1024
    $region21: #{tpu_custom_call.1} parent=1 // pred_fallthru
      _
    %2372 = vsyncpa [#allocation3], 1

</llo_original>
